<compile_context>
chip_gen: v7x
topology: tpu7x:2x2x1
jax: 0.10.0
libtpu: 0.0.40
codegen_flags: <defaults>
</compile_context>

<pallas_src>
import functools

import jax
import jax.numpy as jnp
from jax.experimental import pallas as pl
from jax.experimental.pallas import tpu as pltpu

EPS = 1e-5
VMEM_LIMIT_BYTES = 48 * 1024 * 1024  # fits v7x (64 MiB physical) and v5e/v6e (128 MiB)


def _linear1_stats_kernel(x_ref, w_ref, b_ref, h_ref, stats_ref, *, n_rows, tm, masked):
    """h = x @ W1 + b1 ; emit per-tile [sum(h), sum(h^2)] per feature."""
    x = x_ref[...].astype(jnp.bfloat16)  # in-kernel cast; hides under DMA/MXU
    h = jnp.dot(x, w_ref[...], preferred_element_type=jnp.float32) + b_ref[...]
    if masked:  # only emitted when n % tm != 0 (ragged last tile)
        row = jax.lax.broadcasted_iota(jnp.int32, (tm, 1), 0) + pl.program_id(0) * tm
        hm = jnp.where(row < n_rows, h, 0.0)
    else:
        hm = h
    stats_ref[0, 0:1, :] = jnp.sum(hm, axis=0, keepdims=True)
    stats_ref[0, 1:2, :] = jnp.sum(hm * hm, axis=0, keepdims=True)
    h_ref[...] = h.astype(h_ref.dtype)


def _bn_relu_linear2_kernel(h_ref, s1_ref, t1_ref, w_ref, b_ref,
                            z_ref, stats_ref, *, n_rows, tm, masked):
    """a = relu(h*s1 + t1) ; z = a @ W2 + b2 ; emit per-tile [sum(z), sum(z^2)]."""
    h = h_ref[...].astype(jnp.float32)
    a = jnp.maximum(h * s1_ref[...] + t1_ref[...], 0.0)          # BN1 affine + ReLU (f32)
    z = jnp.dot(a.astype(jnp.bfloat16), w_ref[...],
                preferred_element_type=jnp.float32) + b_ref[...]
    if masked:
        row = jax.lax.broadcasted_iota(jnp.int32, (tm, 1), 0) + pl.program_id(0) * tm
        zm = jnp.where(row < n_rows, z, 0.0)
    else:
        zm = z
    stats_ref[0, 0:1, :] = jnp.sum(zm, axis=0, keepdims=True)
    stats_ref[0, 1:2, :] = jnp.sum(zm * zm, axis=0, keepdims=True)
    z_ref[...] = z.astype(z_ref.dtype)


def _bn2_kernel(z_ref, s2_ref, t2_ref, o_ref):
    """Final BatchNorm1d(out_dim, affine=False): y = z * s2 + t2."""
    z = z_ref[...].astype(jnp.float32)
    o_ref[...] = (z * s2_ref[...] + t2_ref[...]).astype(o_ref.dtype)


def _pick_tm(n):
    # 256-row tiles fill the v6e/v7x MXU M-dim and halve grid steps, while any
    # n >= 512 still yields nt >= 2 (keeps both v7x TensorCores busy).
    if n >= 512:
        return 256
    if n >= 128:
        return 128
    return n  # tiny batch: single whole-batch tile (block dim == full dim is legal)


def _pick_tm3(n, tm):
    # Stage 3 is a trivial HBM-bound affine: use the fattest row tile that still
    # leaves >= 2 grid steps (megacore on v7x) to approach HBM roofline.
    tm3 = tm
    for cand in (256, 512, 1024):
        if n >= 2 * cand:
            tm3 = cand
    return tm3


@jax.jit
def projector_forward(x, w1, b1, g1, beta1, w2, b2):
    n, in_dim = x.shape
    hidden = w1.shape[1]
    out_dim = w2.shape[1]

    tm = _pick_tm(n)
    tm3 = _pick_tm3(n, tm)
    nt = pl.cdiv(n, tm)
    nt3 = pl.cdiv(n, tm3)
    masked = (n % tm) != 0  # static: ragged path only compiled when needed

    # No-op converts when the caller already pre-cast the weights to bf16.
    w1b = w1.astype(jnp.bfloat16)
    w2b = w2.astype(jnp.bfloat16)
    b1f = b1.reshape(1, hidden).astype(jnp.float32)
    g1f = g1.reshape(1, hidden).astype(jnp.float32)
    beta1f = beta1.reshape(1, hidden).astype(jnp.float32)
    b2f = b2.reshape(1, out_dim).astype(jnp.float32)

    cparams = pltpu.CompilerParams(
        dimension_semantics=("parallel",),
        vmem_limit_bytes=VMEM_LIMIT_BYTES,
    )

    # ---- Stage 1: Linear1 + partial BN1 statistics ---------------------------
    h, stats1 = pl.pallas_call(
        functools.partial(_linear1_stats_kernel, n_rows=n, tm=tm, masked=masked),
        out_shape=(jax.ShapeDtypeStruct((n, hidden), jnp.bfloat16),
                   jax.ShapeDtypeStruct((nt, 2, hidden), jnp.float32)),
        grid=(nt,),
        in_specs=[
            pl.BlockSpec((tm, in_dim), lambda i: (i, 0)),      # x tile (f32, pipelined)
            pl.BlockSpec((in_dim, hidden), lambda i: (0, 0)),  # W1 (VMEM-resident)
            pl.BlockSpec((1, hidden), lambda i: (0, 0)),       # b1
        ],
        out_specs=(
            pl.BlockSpec((tm, hidden), lambda i: (i, 0)),
            pl.BlockSpec((1, 2, hidden), lambda i: (i, 0, 0)),
        ),
        compiler_params=cparams,
    )(x, w1b, b1f)

    # Fold per-tile stats -> BN1 scale/shift (tiny reduction, plain XLA).
    tot1 = jnp.sum(stats1, axis=0)                             # (2, hidden)
    mean1 = tot1[0] / n
    var1 = jnp.maximum(tot1[1] / n - mean1 * mean1, 0.0)       # biased batch var
    inv1 = jax.lax.rsqrt(var1 + EPS)
    s1 = (g1f[0] * inv1).reshape(1, hidden)
    t1 = (beta1f[0] - mean1 * g1f[0] * inv1).reshape(1, hidden)

    # ---- Stage 2: BN1 affine + ReLU + Linear2 + partial BN2 statistics -------
    z, stats2 = pl.pallas_call(
        functools.partial(_bn_relu_linear2_kernel, n_rows=n, tm=tm, masked=masked),
        out_shape=(jax.ShapeDtypeStruct((n, out_dim), jnp.bfloat16),
                   jax.ShapeDtypeStruct((nt, 2, out_dim), jnp.float32)),
        grid=(nt,),
        in_specs=[
            pl.BlockSpec((tm, hidden), lambda i: (i, 0)),       # h tile
            pl.BlockSpec((1, hidden), lambda i: (0, 0)),        # BN1 scale
            pl.BlockSpec((1, hidden), lambda i: (0, 0)),        # BN1 shift
            pl.BlockSpec((hidden, out_dim), lambda i: (0, 0)),  # W2 (VMEM-resident)
            pl.BlockSpec((1, out_dim), lambda i: (0, 0)),       # b2
        ],
        out_specs=(
            pl.BlockSpec((tm, out_dim), lambda i: (i, 0)),
            pl.BlockSpec((1, 2, out_dim), lambda i: (i, 0, 0)),
        ),
        compiler_params=cparams,
    )(h, s1, t1, w2b, b2f)

    tot2 = jnp.sum(stats2, axis=0)
    mean2 = tot2[0] / n
    var2 = jnp.maximum(tot2[1] / n - mean2 * mean2, 0.0)
    inv2 = jax.lax.rsqrt(var2 + EPS)
    s2 = inv2.reshape(1, out_dim)
    t2 = (-mean2 * inv2).reshape(1, out_dim)

    # ---- Stage 3: final BatchNorm1d(out_dim, affine=False), fat row tiles ----
    y = pl.pallas_call(
        _bn2_kernel,
        out_shape=jax.ShapeDtypeStruct((n, out_dim), jnp.float32),
        grid=(nt3,),
        in_specs=[
            pl.BlockSpec((tm3, out_dim), lambda i: (i, 0)),
            pl.BlockSpec((1, out_dim), lambda i: (0, 0)),
            pl.BlockSpec((1, out_dim), lambda i: (0, 0)),
        ],
        out_specs=pl.BlockSpec((tm3, out_dim), lambda i: (i, 0)),
        compiler_params=cparams,
    )(z, s2, t2)
    return y


if __name__ == "__main__":
    # Small but lane-friendly shapes: feature dims are multiples of 128 lanes and
    # the batch splits into two 128-row MXU tiles (module defaults would be
    # hidden=512 / out=2048; kept small for the demo).
    batch, in_dim, hidden_dim, out_dim = 256, 128, 256, 512

    key = jax.random.PRNGKey(0)
    kx, k1, k2 = jax.random.split(key, 3)
    x = jax.random.normal(kx, (batch, in_dim), jnp.float32)

    bound1 = 1.0 / jnp.sqrt(in_dim)
    bound2 = 1.0 / jnp.sqrt(hidden_dim)
    w1 = jax.random.uniform(k1, (in_dim, hidden_dim), jnp.float32, -bound1, bound1)
    b1 = jnp.zeros((1, hidden_dim), jnp.float32)
    g1 = jnp.ones((1, hidden_dim), jnp.float32)      # BatchNorm1d gamma
    beta1 = jnp.zeros((1, hidden_dim), jnp.float32)  # BatchNorm1d beta
    w2 = jax.random.uniform(k2, (hidden_dim, out_dim), jnp.float32, -bound2, bound2)
    b2 = jnp.zeros((1, out_dim), jnp.float32)

    # Pre-cast weights to bf16 once, outside the jitted forward (perf review item).
    w1_bf = w1.astype(jnp.bfloat16)
    w2_bf = w2.astype(jnp.bfloat16)

    out = projector_forward(x, w1_bf, b1, g1, beta1, w2_bf, b2)
    jax.block_until_ready(out)

    # Pure-JAX reference using the same bf16 matmul-input precision as the MXU path.
    xb = x.astype(jnp.bfloat16).astype(jnp.float32)
    w1r = w1.astype(jnp.bfloat16).astype(jnp.float32)
    w2r = w2.astype(jnp.bfloat16).astype(jnp.float32)
    h = xb @ w1r + b1
    h = (h - h.mean(0, keepdims=True)) * jax.lax.rsqrt(h.var(0, keepdims=True) + EPS)
    h = jnp.maximum(h * g1 + beta1, 0.0)
    z = h @ w2r + b2
    ref = (z - z.mean(0, keepdims=True)) * jax.lax.rsqrt(z.var(0, keepdims=True) + EPS)

    assert out.shape == (batch, out_dim)
    assert jnp.allclose(out, ref, atol=5e-2, rtol=5e-2), float(jnp.max(jnp.abs(out - ref)))
    print("KERNEL_OK")
</pallas_src>

<mosaic_0001>
module attributes {stable_mosaic.version = 11 : i64} {
  func.func @_linear1_stats_kernel(%arg0: i32, %arg1: memref<128x128xf32, #tpu.memory_space<vmem>>, %arg2: memref<128x256xbf16, #tpu.memory_space<vmem>>, %arg3: memref<1x256xf32, #tpu.memory_space<vmem>>, %arg4: memref<128x256xbf16, #tpu.memory_space<vmem>>, %arg5: memref<1x2x256xf32, #tpu.memory_space<vmem>>) attributes {dimension_semantics = [#tpu.dimension_semantics<parallel>], iteration_bounds = array<i64: 2>, scalar_prefetch = 0 : i64, scratch_operands = 0 : i64, tpu.core_type = #tpu.core_type<tc>, window_params = [{transform_indices = @transform_0, window_bounds = array<i64: 128, 128>}, {pipeline_mode = #tpu.pipeline_mode<synchronous>, transform_indices = @transform_1, window_bounds = array<i64: 128, 256>}, {pipeline_mode = #tpu.pipeline_mode<synchronous>, transform_indices = @transform_2, window_bounds = array<i64: 1, 256>}, {transform_indices = @transform_3, window_bounds = array<i64: 128, 256>}, {transform_indices = @transform_4, window_bounds = array<i64: 1, 2, 256>}]} {
    %c0 = arith.constant 0 : index
    %c0_0 = arith.constant 0 : index
    %0 = vector.load %arg1[%c0, %c0_0] : memref<128x128xf32, #tpu.memory_space<vmem>>, vector<128x128xf32>
    %1 = arith.truncf %0 : vector<128x128xf32> to vector<128x128xbf16>
    %c0_1 = arith.constant 0 : index
    %c0_2 = arith.constant 0 : index
    %2 = vector.load %arg2[%c0_1, %c0_2] : memref<128x256xbf16, #tpu.memory_space<vmem>>, vector<128x256xbf16>
    %cst = arith.constant dense<0.000000e+00> : vector<128x256xf32>
    %3 = tpu.matmul %1, %2, %cst {dimension_numbers = #tpu.dot_dimension_numbers<[1], [0], [0], [1], [0, 0, 1, 1], [], []>} : vector<128x128xbf16>, vector<128x256xbf16>, vector<128x256xf32> -> vector<128x256xf32>
    %c0_3 = arith.constant 0 : index
    %c0_4 = arith.constant 0 : index
    %4 = vector.load %arg3[%c0_3, %c0_4] : memref<1x256xf32, #tpu.memory_space<vmem>>, vector<1x256xf32>
    %5 = vector.broadcast %4 : vector<1x256xf32> to vector<128x256xf32>
    %6 = arith.addf %3, %5 : vector<128x256xf32>
    %cst_5 = arith.constant dense<0.000000e+00> : vector<256xf32>
    %7 = vector.multi_reduction <add>, %6, %cst_5 [0] : vector<128x256xf32> to vector<256xf32>
    %8 = vector.shape_cast %7 : vector<256xf32> to vector<1x256xf32>
    %c0_6 = arith.constant 0 : index
    %c0_7 = arith.constant 0 : index
    %c0_8 = arith.constant 0 : index
    %9 = vector.load %arg5[%c0_6, %c0_7, %c0_8] : memref<1x2x256xf32, #tpu.memory_space<vmem>>, vector<1x1x256xf32>
    %10 = vector.shape_cast %9 : vector<1x1x256xf32> to vector<1x256xf32>
    %11 = vector.shape_cast %8 : vector<1x256xf32> to vector<1x1x256xf32>
    tpu.vector_store %arg5[%c0_6, %c0_7, %c0_8], %11 {strides = array<i32>} : memref<1x2x256xf32, #tpu.memory_space<vmem>>, vector<1x1x256xf32>,
    %12 = arith.mulf %6, %6 : vector<128x256xf32>
    %cst_9 = arith.constant dense<0.000000e+00> : vector<256xf32>
    %13 = vector.multi_reduction <add>, %12, %cst_9 [0] : vector<128x256xf32> to vector<256xf32>
    %14 = vector.shape_cast %13 : vector<256xf32> to vector<1x256xf32>
    %c0_10 = arith.constant 0 : index
    %c1 = arith.constant 1 : index
    %c0_11 = arith.constant 0 : index
    %15 = vector.load %arg5[%c0_10, %c1, %c0_11] : memref<1x2x256xf32, #tpu.memory_space<vmem>>, vector<1x1x256xf32>
    %16 = vector.shape_cast %15 : vector<1x1x256xf32> to vector<1x256xf32>
    %17 = vector.shape_cast %14 : vector<1x256xf32> to vector<1x1x256xf32>
    tpu.vector_store %arg5[%c0_10, %c1, %c0_11], %17 {strides = array<i32>} : memref<1x2x256xf32, #tpu.memory_space<vmem>>, vector<1x1x256xf32>,
    %18 = arith.truncf %6 : vector<128x256xf32> to vector<128x256xbf16>
    %c0_12 = arith.constant 0 : index
    %c0_13 = arith.constant 0 : index
    %19 = vector.load %arg4[%c0_12, %c0_13] : memref<128x256xbf16, #tpu.memory_space<vmem>>, vector<128x256xbf16>
    tpu.vector_store %arg4[%c0_12, %c0_13], %18 {strides = array<i32>} : memref<128x256xbf16, #tpu.memory_space<vmem>>, vector<128x256xbf16>,
    return
  }
  func.func @transform_0(%arg0: i32) -> (i32, i32) {
    %c0_i32 = arith.constant 0 : i32
    %c0_i32_0 = arith.constant 0 : i32
    return %arg0, %c0_i32 : i32, i32
  }
  func.func @transform_1(%arg0: i32) -> (i32, i32) {
    %c0_i32 = arith.constant 0 : i32
    %c0_i32_0 = arith.constant 0 : i32
    %c0_i32_1 = arith.constant 0 : i32
    return %c0_i32, %c0_i32_0 : i32, i32
  }
  func.func @transform_2(%arg0: i32) -> (i32, i32) {
    %c0_i32 = arith.constant 0 : i32
    %c0_i32_0 = arith.constant 0 : i32
    %c0_i32_1 = arith.constant 0 : i32
    return %c0_i32, %c0_i32_0 : i32, i32
  }
  func.func @transform_3(%arg0: i32) -> (i32, i32) {
    %c0_i32 = arith.constant 0 : i32
    %c0_i32_0 = arith.constant 0 : i32
    return %arg0, %c0_i32 : i32, i32
  }
  func.func @transform_4(%arg0: i32) -> (i32, i32, i32) {
    %c0_i32 = arith.constant 0 : i32
    %c0_i32_0 = arith.constant 0 : i32
    %c0_i32_1 = arith.constant 0 : i32
    return %arg0, %c0_i32, %c0_i32_0 : i32, i32, i32
  }
}

module attributes {stable_mosaic.version = 11 : i64} {
  func.func @_bn_relu_linear2_kernel(%arg0: i32, %arg1: memref<128x256xbf16, #tpu.memory_space<vmem>>, %arg2: memref<1x256xf32, #tpu.memory_space<vmem>>, %arg3: memref<1x256xf32, #tpu.memory_space<vmem>>, %arg4: memref<256x512xbf16, #tpu.memory_space<vmem>>, %arg5: memref<1x512xf32, #tpu.memory_space<vmem>>, %arg6: memref<128x512xbf16, #tpu.memory_space<vmem>>, %arg7: memref<1x2x512xf32, #tpu.memory_space<vmem>>) attributes {dimension_semantics = [#tpu.dimension_semantics<parallel>], iteration_bounds = array<i64: 2>, scalar_prefetch = 0 : i64, scratch_operands = 0 : i64, tpu.core_type = #tpu.core_type<tc>, window_params = [{transform_indices = @transform_0, window_bounds = array<i64: 128, 256>}, {pipeline_mode = #tpu.pipeline_mode<synchronous>, transform_indices = @transform_1, window_bounds = array<i64: 1, 256>}, {pipeline_mode = #tpu.pipeline_mode<synchronous>, transform_indices = @transform_2, window_bounds = array<i64: 1, 256>}, {pipeline_mode = #tpu.pipeline_mode<synchronous>, transform_indices = @transform_3, window_bounds = array<i64: 256, 512>}, {pipeline_mode = #tpu.pipeline_mode<synchronous>, transform_indices = @transform_4, window_bounds = array<i64: 1, 512>}, {transform_indices = @transform_5, window_bounds = array<i64: 128, 512>}, {transform_indices = @transform_6, window_bounds = array<i64: 1, 2, 512>}]} {
    %c0 = arith.constant 0 : index
    %c0_0 = arith.constant 0 : index
    %0 = vector.load %arg1[%c0, %c0_0] : memref<128x256xbf16, #tpu.memory_space<vmem>>, vector<128x256xbf16>
    %1 = arith.extf %0 : vector<128x256xbf16> to vector<128x256xf32>
    %c0_1 = arith.constant 0 : index
    %c0_2 = arith.constant 0 : index
    %2 = vector.load %arg2[%c0_1, %c0_2] : memref<1x256xf32, #tpu.memory_space<vmem>>, vector<1x256xf32>
    %3 = vector.broadcast %2 : vector<1x256xf32> to vector<128x256xf32>
    %4 = arith.mulf %1, %3 : vector<128x256xf32>
    %c0_3 = arith.constant 0 : index
    %c0_4 = arith.constant 0 : index
    %5 = vector.load %arg3[%c0_3, %c0_4] : memref<1x256xf32, #tpu.memory_space<vmem>>, vector<1x256xf32>
    %6 = vector.broadcast %5 : vector<1x256xf32> to vector<128x256xf32>
    %7 = arith.addf %4, %6 : vector<128x256xf32>
    %cst = arith.constant 0.000000e+00 : f32
    %8 = vector.broadcast %cst : f32 to vector<128x256xf32>
    %9 = arith.maximumf %7, %8 : vector<128x256xf32>
    %10 = arith.truncf %9 : vector<128x256xf32> to vector<128x256xbf16>
    %c0_5 = arith.constant 0 : index
    %c0_6 = arith.constant 0 : index
    %11 = vector.load %arg4[%c0_5, %c0_6] : memref<256x512xbf16, #tpu.memory_space<vmem>>, vector<256x512xbf16>
    %cst_7 = arith.constant dense<0.000000e+00> : vector<128x512xf32>
    %12 = tpu.matmul %10, %11, %cst_7 {dimension_numbers = #tpu.dot_dimension_numbers<[1], [0], [0], [1], [0, 0, 1, 1], [], []>} : vector<128x256xbf16>, vector<256x512xbf16>, vector<128x512xf32> -> vector<128x512xf32>
    %c0_8 = arith.constant 0 : index
    %c0_9 = arith.constant 0 : index
    %13 = vector.load %arg5[%c0_8, %c0_9] : memref<1x512xf32, #tpu.memory_space<vmem>>, vector<1x512xf32>
    %14 = vector.broadcast %13 : vector<1x512xf32> to vector<128x512xf32>
    %15 = arith.addf %12, %14 : vector<128x512xf32>
    %cst_10 = arith.constant dense<0.000000e+00> : vector<512xf32>
    %16 = vector.multi_reduction <add>, %15, %cst_10 [0] : vector<128x512xf32> to vector<512xf32>
    %17 = vector.shape_cast %16 : vector<512xf32> to vector<1x512xf32>
    %c0_11 = arith.constant 0 : index
    %c0_12 = arith.constant 0 : index
    %c0_13 = arith.constant 0 : index
    %18 = vector.load %arg7[%c0_11, %c0_12, %c0_13] : memref<1x2x512xf32, #tpu.memory_space<vmem>>, vector<1x1x512xf32>
    %19 = vector.shape_cast %18 : vector<1x1x512xf32> to vector<1x512xf32>
    %20 = vector.shape_cast %17 : vector<1x512xf32> to vector<1x1x512xf32>
    tpu.vector_store %arg7[%c0_11, %c0_12, %c0_13], %20 {strides = array<i32>} : memref<1x2x512xf32, #tpu.memory_space<vmem>>, vector<1x1x512xf32>,
    %21 = arith.mulf %15, %15 : vector<128x512xf32>
    %cst_14 = arith.constant dense<0.000000e+00> : vector<512xf32>
    %22 = vector.multi_reduction <add>, %21, %cst_14 [0] : vector<128x512xf32> to vector<512xf32>
    %23 = vector.shape_cast %22 : vector<512xf32> to vector<1x512xf32>
    %c0_15 = arith.constant 0 : index
    %c1 = arith.constant 1 : index
    %c0_16 = arith.constant 0 : index
    %24 = vector.load %arg7[%c0_15, %c1, %c0_16] : memref<1x2x512xf32, #tpu.memory_space<vmem>>, vector<1x1x512xf32>
    %25 = vector.shape_cast %24 : vector<1x1x512xf32> to vector<1x512xf32>
    %26 = vector.shape_cast %23 : vector<1x512xf32> to vector<1x1x512xf32>
    tpu.vector_store %arg7[%c0_15, %c1, %c0_16], %26 {strides = array<i32>} : memref<1x2x512xf32, #tpu.memory_space<vmem>>, vector<1x1x512xf32>,
    %27 = arith.truncf %15 : vector<128x512xf32> to vector<128x512xbf16>
    %c0_17 = arith.constant 0 : index
    %c0_18 = arith.constant 0 : index
    %28 = vector.load %arg6[%c0_17, %c0_18] : memref<128x512xbf16, #tpu.memory_space<vmem>>, vector<128x512xbf16>
    tpu.vector_store %arg6[%c0_17, %c0_18], %27 {strides = array<i32>} : memref<128x512xbf16, #tpu.memory_space<vmem>>, vector<128x512xbf16>,
    return
  }
  func.func @transform_0(%arg0: i32) -> (i32, i32) {
    %c0_i32 = arith.constant 0 : i32
    %c0_i32_0 = arith.constant 0 : i32
    return %arg0, %c0_i32 : i32, i32
  }
  func.func @transform_1(%arg0: i32) -> (i32, i32) {
    %c0_i32 = arith.constant 0 : i32
    %c0_i32_0 = arith.constant 0 : i32
    %c0_i32_1 = arith.constant 0 : i32
    return %c0_i32, %c0_i32_0 : i32, i32
  }
  func.func @transform_2(%arg0: i32) -> (i32, i32) {
    %c0_i32 = arith.constant 0 : i32
    %c0_i32_0 = arith.constant 0 : i32
    %c0_i32_1 = arith.constant 0 : i32
    return %c0_i32, %c0_i32_0 : i32, i32
  }
  func.func @transform_3(%arg0: i32) -> (i32, i32) {
    %c0_i32 = arith.constant 0 : i32
    %c0_i32_0 = arith.constant 0 : i32
    %c0_i32_1 = arith.constant 0 : i32
    return %c0_i32, %c0_i32_0 : i32, i32
  }
  func.func @transform_4(%arg0: i32) -> (i32, i32) {
    %c0_i32 = arith.constant 0 : i32
    %c0_i32_0 = arith.constant 0 : i32
    %c0_i32_1 = arith.constant 0 : i32
    return %c0_i32, %c0_i32_0 : i32, i32
  }
  func.func @transform_5(%arg0: i32) -> (i32, i32) {
    %c0_i32 = arith.constant 0 : i32
    %c0_i32_0 = arith.constant 0 : i32
    return %arg0, %c0_i32 : i32, i32
  }
  func.func @transform_6(%arg0: i32) -> (i32, i32, i32) {
    %c0_i32 = arith.constant 0 : i32
    %c0_i32_0 = arith.constant 0 : i32
    %c0_i32_1 = arith.constant 0 : i32
    return %arg0, %c0_i32, %c0_i32_0 : i32, i32, i32
  }
}

module attributes {stable_mosaic.version = 11 : i64} {
  func.func @_bn2_kernel(%arg0: i32, %arg1: memref<128x512xbf16, #tpu.memory_space<vmem>>, %arg2: memref<1x512xf32, #tpu.memory_space<vmem>>, %arg3: memref<1x512xf32, #tpu.memory_space<vmem>>, %arg4: memref<128x512xf32, #tpu.memory_space<vmem>>) attributes {dimension_semantics = [#tpu.dimension_semantics<parallel>], iteration_bounds = array<i64: 2>, scalar_prefetch = 0 : i64, scratch_operands = 0 : i64, tpu.core_type = #tpu.core_type<tc>, window_params = [{transform_indices = @transform_0, window_bounds = array<i64: 128, 512>}, {pipeline_mode = #tpu.pipeline_mode<synchronous>, transform_indices = @transform_1, window_bounds = array<i64: 1, 512>}, {pipeline_mode = #tpu.pipeline_mode<synchronous>, transform_indices = @transform_2, window_bounds = array<i64: 1, 512>}, {transform_indices = @transform_3, window_bounds = array<i64: 128, 512>}]} {
    %c0 = arith.constant 0 : index
    %c0_0 = arith.constant 0 : index
    %0 = vector.load %arg1[%c0, %c0_0] : memref<128x512xbf16, #tpu.memory_space<vmem>>, vector<128x512xbf16>
    %1 = arith.extf %0 : vector<128x512xbf16> to vector<128x512xf32>
    %c0_1 = arith.constant 0 : index
    %c0_2 = arith.constant 0 : index
    %2 = vector.load %arg2[%c0_1, %c0_2] : memref<1x512xf32, #tpu.memory_space<vmem>>, vector<1x512xf32>
    %3 = vector.broadcast %2 : vector<1x512xf32> to vector<128x512xf32>
    %4 = arith.mulf %1, %3 : vector<128x512xf32>
    %c0_3 = arith.constant 0 : index
    %c0_4 = arith.constant 0 : index
    %5 = vector.load %arg3[%c0_3, %c0_4] : memref<1x512xf32, #tpu.memory_space<vmem>>, vector<1x512xf32>
    %6 = vector.broadcast %5 : vector<1x512xf32> to vector<128x512xf32>
    %7 = arith.addf %4, %6 : vector<128x512xf32>
    %c0_5 = arith.constant 0 : index
    %c0_6 = arith.constant 0 : index
    %8 = vector.load %arg4[%c0_5, %c0_6] : memref<128x512xf32, #tpu.memory_space<vmem>>, vector<128x512xf32>
    tpu.vector_store %arg4[%c0_5, %c0_6], %7 {strides = array<i32>} : memref<128x512xf32, #tpu.memory_space<vmem>>, vector<128x512xf32>,
    return
  }
  func.func @transform_0(%arg0: i32) -> (i32, i32) {
    %c0_i32 = arith.constant 0 : i32
    %c0_i32_0 = arith.constant 0 : i32
    return %arg0, %c0_i32 : i32, i32
  }
  func.func @transform_1(%arg0: i32) -> (i32, i32) {
    %c0_i32 = arith.constant 0 : i32
    %c0_i32_0 = arith.constant 0 : i32
    %c0_i32_1 = arith.constant 0 : i32
    return %c0_i32, %c0_i32_0 : i32, i32
  }
  func.func @transform_2(%arg0: i32) -> (i32, i32) {
    %c0_i32 = arith.constant 0 : i32
    %c0_i32_0 = arith.constant 0 : i32
    %c0_i32_1 = arith.constant 0 : i32
    return %c0_i32, %c0_i32_0 : i32, i32
  }
  func.func @transform_3(%arg0: i32) -> (i32, i32) {
    %c0_i32 = arith.constant 0 : i32
    %c0_i32_0 = arith.constant 0 : i32
    return %arg0, %c0_i32 : i32, i32
  }
}

</mosaic_0001>

<llo_original>
// kernel: mul.1
$region0: #{mul.1}
  #allocation0 [shape = 's32[1]{0}', space=sflag, size = 0x4, scoped, tag = 'scoped memory for mul.1']
  %s0 = inlined_call_operand.vmem [shape: f32[1,256], index: 0, kind: input, shape index: {}]
  %s1 = inlined_call_operand.vmem [shape: f32[1,256], index: 1, kind: input, shape index: {}]
  %s2 = inlined_call_operand.vmem [shape: f32[1,256], index: 2, kind: output, shape index: {}]
  %v3 = vld [vmem:[%s0] sm:$0x1]
  %v4 = vld [vmem:[%s1] sm:$0x1]
  %5 = xla_tuple %v3, %v4
  %6 = xla_tuple %5
  %v7 = vmul.f32 %v3, %v4
  %8 = xla_tuple %v7
  %9 = vst [vmem:[%s2] sm:$0x1] %v7
  %s10 = scalar_lea.vmem %s0, 1
  %v11 = vld [vmem:[%s10] sm:$0x1]
  %s12 = scalar_lea.vmem %s1, 1
  %v13 = vld [vmem:[%s12] sm:$0x1]
  %14 = xla_tuple %v11, %v13
  %15 = xla_tuple %14
  %v16 = vmul.f32 %v11, %v13
  %17 = xla_tuple %v16
  %s18 = scalar_lea.vmem %s2, 1
  %19 = vst [vmem:[%s18] sm:$0x1] %v16

// kernel: projector_forward.5
$region0: #{projector_forward.5}
  #allocation0 [shape = 'u32[]', space=smem, size = 0x4, offset = 0x4, fixed_abs, tag = 'smem constant byte address 0x4 - core index']
  #allocation1 [shape = 'u32[144,128]{1,0:T(1,128)}', space=vmem, size = 0x12000, scoped, tag = 'internal scratch']
  %s0 = inlined_call_operand.vmem [shape: bf16[256,512], index: 0, kind: input, shape index: {}]
  %s1 = inlined_call_operand.vmem [shape: f32[1,512], index: 1, kind: input, shape index: {}]
  %s2 = inlined_call_operand.vmem [shape: f32[1,512], index: 2, kind: input, shape index: {}]
  %s3 = inlined_call_operand.hbm [shape: f32[256,512], index: 3, kind: output, shape index: {}]
  %s4 = sld [smem:[#allocation0]]
  $region45: #{projector_forward.5} parent=0
    _
  %s6 = ssub.s32 1, %s4
  %s7 = scalar_select 0, %s6, %s4
  $region1: #{projector_forward.5} parent=0
    #allocation2 [shape = 'u8[524288]{0}', space=vmem, size = 0x80000, scoped, tag = 'output window, operand 0']
    #allocation3 [shape = 's32[2]{0}', space=sflag, size = 0x8, scoped, tag = 'scoped memory for projector_forward.5']
    %8 = vsyncpa [#allocation3], 0
    %s9 = scalar_lea.sflag [#allocation3], 1
    %10 = vsyncpa %s9, 0
    loop: start=0, step=1, limit=4
    $region2: #{projector_forward.5} parent=1 // loop_pre_header
      _
    $region3: #{projector_forward.5} parent=1 // loop_header
      %s12 = sphi 0, %s16
      %p13 = scmp.ge.s32.totalorder %s12, 4
      %s22 = sphi 0, %s24
      %s25 = sphi 0, %s22
      %s26 = sphi 0, %s25
      %s42 = sphi 0, %s26
      %s46 = sphi 0, %s46
      %s48 = sphi 0, %s46
      %s49 = sphi 0, %s48
      %s63 = sphi 0, %s49
      %s67 = sphi 0, %s67
      %s69 = sphi 0, %s67
      %s70 = sphi 0, %s69
      %s84 = sphi 0, %s70
      %s90 = sphi 0, %s92
      %s93 = sphi 0, %s90
      %s94 = sphi 0, %s93
      %s110 = sphi 0, %s94
    $region4: #{projector_forward.5} parent=1 // loop_header_branch
      %15 = sbr.rel (%p13) target = $region8
    $region5: #{projector_forward.5} parent=1 // loop_body
      %s17 = ssub.s32 %s12, 1
      %s18 = ssub.s32 %s12, 2
      %s19 = sadd.s32 %s12, 1
      %s20 = ssub.s32 %s12, %s19
      %p21 = scmp.eq.s32.totalorder %s20, 0
      %s23 = sadd.s32 %s22, 1
      %s24 = scalar_select %p21, %s22, %s23
      %p27 = pneg %p21
      %p28 = scmp.eq.s32.totalorder %s12, 1
      %p29 = por %p27, %p28
      %p30 = scmp.ne.s32.totalorder %s22, %s25
      %p31 = scmp.eq.s32.totalorder %s12, 0
      %p32 = por %p30, %p31
      %p33 = scmp.ne.s32.totalorder %s22, %s25
      %p34 = scmp.eq.s32.totalorder %s17, 1
      %p35 = por %p33, %p34
      %p36 = scmp.ne.s32.totalorder %s25, %s26
      %p37 = scmp.eq.s32.totalorder %s17, 0
      %p38 = por %p36, %p37
      %p39 = scmp.ne.s32.totalorder %s25, %s26
      %p40 = scmp.eq.s32.totalorder %s18, 1
      %p41 = por %p39, %p40
      %p43 = scmp.ne.s32.totalorder %s26, %s42
      %p44 = scmp.eq.s32.totalorder %s18, 0
      %p45 = por %p43, %p44
      %s47 = sadd.s32 %s46, 1
      %p50 = scmp.eq.s32.totalorder %s12, 1
      %p51 = scmp.ne.s32.totalorder %s46, %s48
      %p52 = scmp.eq.s32.totalorder %s12, 0
      %p53 = por %p51, %p52
      %p54 = scmp.ne.s32.totalorder %s46, %s48
      %p55 = scmp.eq.s32.totalorder %s17, 1
      %p56 = por %p54, %p55
      %p57 = scmp.ne.s32.totalorder %s48, %s49
      %p58 = scmp.eq.s32.totalorder %s17, 0
      %p59 = por %p57, %p58
      %p60 = scmp.ne.s32.totalorder %s48, %s49
      %p61 = scmp.eq.s32.totalorder %s18, 1
      %p62 = por %p60, %p61
      %p64 = scmp.ne.s32.totalorder %s49, %s63
      %p65 = scmp.eq.s32.totalorder %s18, 0
      %p66 = por %p64, %p65
      %s68 = sadd.s32 %s67, 1
      %p71 = scmp.eq.s32.totalorder %s12, 1
      %p72 = scmp.ne.s32.totalorder %s67, %s69
      %p73 = scmp.eq.s32.totalorder %s12, 0
      %p74 = por %p72, %p73
      %p75 = scmp.ne.s32.totalorder %s67, %s69
      %p76 = scmp.eq.s32.totalorder %s17, 1
      %p77 = por %p75, %p76
      %p78 = scmp.ne.s32.totalorder %s69, %s70
      %p79 = scmp.eq.s32.totalorder %s17, 0
      %p80 = por %p78, %p79
      %p81 = scmp.ne.s32.totalorder %s69, %s70
      %p82 = scmp.eq.s32.totalorder %s18, 1
      %p83 = por %p81, %p82
      %p85 = scmp.ne.s32.totalorder %s70, %s84
      %p86 = scmp.eq.s32.totalorder %s18, 0
      %p87 = por %p85, %p86
      %s88 = ssub.s32 %s12, %s19
      %p89 = scmp.eq.s32.totalorder %s88, 0
      %s91 = sadd.s32 %s90, 1
      %s92 = scalar_select %p89, %s90, %s91
      %p95 = pneg %p89
      %p96 = scmp.eq.s32.totalorder %s12, 1
      %p97 = por %p95, %p96
      %p98 = scmp.ne.s32.totalorder %s90, %s93
      %p99 = scmp.eq.s32.totalorder %s12, 0
      %p100 = por %p98, %p99
      %p101 = scmp.ne.s32.totalorder %s90, %s93
      %p102 = scmp.eq.s32.totalorder %s17, 1
      %p103 = por %p101, %p102
      %p104 = scmp.ne.s32.totalorder %s93, %s94
      %p105 = scmp.eq.s32.totalorder %s17, 0
      %p106 = por %p104, %p105
      %p107 = scmp.ne.s32.totalorder %s93, %s94
      %p108 = scmp.eq.s32.totalorder %s18, 1
      %p109 = por %p107, %p108
      %p111 = scmp.ne.s32.totalorder %s94, %s110
      %p112 = scmp.eq.s32.totalorder %s18, 0
      %p113 = por %p111, %p112
      %p114 = scmp.le.s32.totalorder 1, %s12
      %p115 = scmp.lt.s32.totalorder %s12, 3
      %p116 = pnand %p114, %p115
      %p117 = pneg %p116
      // Predicated region
      $region9: #{projector_forward.5} parent=5 // pred_check
        _
      $region10: #{projector_forward.5} parent=5 // pred_check_branch
        %119 = sbr.rel (%p116) target = $region12
      $region11: #{projector_forward.5} parent=5 // pred_region
        %s120 = ssub.s32 %s12, 1
        // Predicated region
        $region13: #{projector_forward.5} parent=11 // pred_check
          %p121 = pneg %p59
        $region14: #{projector_forward.5} parent=11 // pred_check_branch
          %123 = sbr.rel (%p121) target = $region16
        $region15: #{projector_forward.5} parent=11 // pred_region
          _
        $region16: #{projector_forward.5} parent=11 // pred_fallthru
          _
        // Predicated region
        $region17: #{projector_forward.5} parent=11 // pred_check
          %p124 = pneg %p80
        $region18: #{projector_forward.5} parent=11 // pred_check_branch
          %126 = sbr.rel (%p124) target = $region20
        $region19: #{projector_forward.5} parent=11 // pred_region
          _
        $region20: #{projector_forward.5} parent=11 // pred_fallthru
          _
      $region12: #{projector_forward.5} parent=5 // pred_fallthru
        _
      %p127 = scmp.lt.s32.totalorder %s12, 2
      // Predicated region
      $region21: #{projector_forward.5} parent=5 // pred_check
        %p128 = pneg %p127
      $region22: #{projector_forward.5} parent=5 // pred_check_branch
        %130 = sbr.rel (%p128) target = $region24
      $region23: #{projector_forward.5} parent=5 // pred_region
        // Predicated region
        $region25: #{projector_forward.5} parent=23 // pred_check
          %p131 = pneg %p32
        $region26: #{projector_forward.5} parent=23 // pred_check_branch
          %133 = sbr.rel (%p131) target = $region28
        $region27: #{projector_forward.5} parent=23 // pred_region
          %s134 = smul.u32 16, %s12
          %p135 = scmp.lt.s32.totalorder %s134, 31
          %s136 = scalar_select %p135, %s134, 31
          %s137 = smul.addr %s136, 4
          %s138 = smul.addr %s137, 4
          %s139 = scalar_lea.vmem %s0, %s138
          %s140 = smul.u32 16, %s12
        $region28: #{projector_forward.5} parent=23 // pred_fallthru
          _
      $region24: #{projector_forward.5} parent=5 // pred_fallthru
        _
      %p141 = scmp.le.s32.totalorder 1, %s12
      %p142 = scmp.lt.s32.totalorder %s12, 3
      %p143 = pnand %p141, %p142
      %p144 = pneg %p143
      // Predicated region
      $region29: #{projector_forward.5} parent=5 // pred_check
        _
      $region30: #{projector_forward.5} parent=5 // pred_check_branch
        %146 = sbr.rel (%p143) target = $region32
      $region31: #{projector_forward.5} parent=5 // pred_region
        %s147 = ssub.s32 %s12, 1
        %s148 = smul.u32 16, %s17
        %p149 = scmp.lt.s32.totalorder %s148, 31
        %s150 = scalar_select %p149, %s148, 31
        %s151 = smul.addr %s150, 4
        %s152 = smul.addr %s151, 4
        %s153 = scalar_lea.vmem %s0, %s152
        %p154 = pneg %p38
        %p155 = pneg %p35
        %p156 = pneg %p59
        %p157 = pneg %p56
        %p158 = pneg %p80
        %p159 = pneg %p77
        %p160 = pneg %p106
        %p161 = pneg %p103
        %s162 = sand.u32 %s93, 1
        %s163 = scalar_lea.sflag [#allocation3], %s162
        %s164 = sand.u32 %s93, 1
        %s165 = smul.addr %s164, 512
        %s166 = scalar_lea.vmem [#allocation2], %s165
        %s167 = smul.u32 16, %s17
        %p168 = scmp.lt.s32.totalorder %s167, 31
        %s169 = scalar_select %p168, %s167, 31
        %s170 = smul.addr %s169, 4
        %s171 = smul.addr %s170, 4
        %s172 = scalar_lea.vmem %s0, %s171
        %s173 = smul.u32 16, %s17
        %s174 = smul.u32 16, %s17
        %v175 = vld [vmem:[%s172] sm:$0xff]
        %v176 = vld [vmem:[%s172 + $0x8] sm:$0xff]
        %v177 = vld [vmem:[%s172 + $0x10] sm:$0xff]
        %v178 = vld [vmem:[%s172 + $0x18] sm:$0xff]
        %v179 = vld [vmem:[%s172 + $0x20] sm:$0xff]
        %v180 = vld [vmem:[%s172 + $0x28] sm:$0xff]
        %v181 = vld [vmem:[%s172 + $0x30] sm:$0xff]
        %v182 = vld [vmem:[%s172 + $0x38] sm:$0xff]
        %v183 = vld [vmem:[%s172 + $0x40] sm:$0xff]
        %v184 = vld [vmem:[%s172 + $0x48] sm:$0xff]
        %v185 = vld [vmem:[%s172 + $0x50] sm:$0xff]
        %v186 = vld [vmem:[%s172 + $0x58] sm:$0xff]
        %v187 = vld [vmem:[%s172 + $0x60] sm:$0xff]
        %v188 = vld [vmem:[%s172 + $0x68] sm:$0xff]
        %v189 = vld [vmem:[%s172 + $0x70] sm:$0xff]
        %v190 = vld [vmem:[%s172 + $0x78] sm:$0xff]
        %v191 = vld [vmem:[%s172 + $0x80] sm:$0xff]
        %v192 = vld [vmem:[%s172 + $0x88] sm:$0xff]
        %v193 = vld [vmem:[%s172 + $0x90] sm:$0xff]
        %v194 = vld [vmem:[%s172 + $0x98] sm:$0xff]
        %v195 = vld [vmem:[%s172 + $0xa0] sm:$0xff]
        %v196 = vld [vmem:[%s172 + $0xa8] sm:$0xff]
        %v197 = vld [vmem:[%s172 + $0xb0] sm:$0xff]
        %v198 = vld [vmem:[%s172 + $0xb8] sm:$0xff]
        %v199 = vld [vmem:[%s172 + $0xc0] sm:$0xff]
        %v200 = vld [vmem:[%s172 + $0xc8] sm:$0xff]
        %v201 = vld [vmem:[%s172 + $0xd0] sm:$0xff]
        %v202 = vld [vmem:[%s172 + $0xd8] sm:$0xff]
        %v203 = vld [vmem:[%s172 + $0xe0] sm:$0xff]
        %v204 = vld [vmem:[%s172 + $0xe8] sm:$0xff]
        %v205 = vld [vmem:[%s172 + $0xf0] sm:$0xff]
        %v206 = vld [vmem:[%s172 + $0xf8] sm:$0xff]
        %v207 = vunpack.c.l.bf16 %v175
        %v208 = vunpack.c.h.bf16 %v175
        %v209 = vunpack.c.l.bf16 %v176
        %v210 = vunpack.c.h.bf16 %v176
        %v211 = vunpack.c.l.bf16 %v177
        %v212 = vunpack.c.h.bf16 %v177
        %v213 = vunpack.c.l.bf16 %v178
        %v214 = vunpack.c.h.bf16 %v178
        %v215 = vunpack.c.l.bf16 %v179
        %v216 = vunpack.c.h.bf16 %v179
        %v217 = vunpack.c.l.bf16 %v180
        %v218 = vunpack.c.h.bf16 %v180
        %v219 = vunpack.c.l.bf16 %v181
        %v220 = vunpack.c.h.bf16 %v181
        %v221 = vunpack.c.l.bf16 %v182
        %v222 = vunpack.c.h.bf16 %v182
        %v223 = vunpack.c.l.bf16 %v183
        %v224 = vunpack.c.h.bf16 %v183
        %v225 = vunpack.c.l.bf16 %v184
        %v226 = vunpack.c.h.bf16 %v184
        %v227 = vunpack.c.l.bf16 %v185
        %v228 = vunpack.c.h.bf16 %v185
        %v229 = vunpack.c.l.bf16 %v186
        %v230 = vunpack.c.h.bf16 %v186
        %v231 = vunpack.c.l.bf16 %v187
        %v232 = vunpack.c.h.bf16 %v187
        %v233 = vunpack.c.l.bf16 %v188
        %v234 = vunpack.c.h.bf16 %v188
        %v235 = vunpack.c.l.bf16 %v189
        %v236 = vunpack.c.h.bf16 %v189
        %v237 = vunpack.c.l.bf16 %v190
        %v238 = vunpack.c.h.bf16 %v190
        %v239 = vunpack.c.l.bf16 %v191
        %v240 = vunpack.c.h.bf16 %v191
        %v241 = vunpack.c.l.bf16 %v192
        %v242 = vunpack.c.h.bf16 %v192
        %v243 = vunpack.c.l.bf16 %v193
        %v244 = vunpack.c.h.bf16 %v193
        %v245 = vunpack.c.l.bf16 %v194
        %v246 = vunpack.c.h.bf16 %v194
        %v247 = vunpack.c.l.bf16 %v195
        %v248 = vunpack.c.h.bf16 %v195
        %v249 = vunpack.c.l.bf16 %v196
        %v250 = vunpack.c.h.bf16 %v196
        %v251 = vunpack.c.l.bf16 %v197
        %v252 = vunpack.c.h.bf16 %v197
        %v253 = vunpack.c.l.bf16 %v198
        %v254 = vunpack.c.h.bf16 %v198
        %v255 = vunpack.c.l.bf16 %v199
        %v256 = vunpack.c.h.bf16 %v199
        %v257 = vunpack.c.l.bf16 %v200
        %v258 = vunpack.c.h.bf16 %v200
        %v259 = vunpack.c.l.bf16 %v201
        %v260 = vunpack.c.h.bf16 %v201
        %v261 = vunpack.c.l.bf16 %v202
        %v262 = vunpack.c.h.bf16 %v202
        %v263 = vunpack.c.l.bf16 %v203
        %v264 = vunpack.c.h.bf16 %v203
        %v265 = vunpack.c.l.bf16 %v204
        %v266 = vunpack.c.h.bf16 %v204
        %v267 = vunpack.c.l.bf16 %v205
        %v268 = vunpack.c.h.bf16 %v205
        %v269 = vunpack.c.l.bf16 %v206
        %v270 = vunpack.c.h.bf16 %v206
        %v271 = vld [vmem:[%s1] sm:$0xf]
        %v273 = vlaneseq
        %v274 = vshrl.u32 %v273, 7
        %v275 = vsub.s32 0, %v274
        %v276 = vrot.slane %v271, %v275
        %v277 = vlaneseq
        %v278 = vshrl.u32 %v277, 7
        %v279 = vsub.s32 1, %v278
        %v280 = vrot.slane %v271, %v279
        %v281 = vlaneseq
        %v282 = vshrl.u32 %v281, 7
        %v283 = vsub.s32 2, %v282
        %v284 = vrot.slane %v271, %v283
        %v285 = vlaneseq
        %v286 = vshrl.u32 %v285, 7
        %v287 = vsub.s32 3, %v286
        %v288 = vrot.slane %v271, %v287
        %v293 = vmul.f32 %v207, %v276
        %v294 = vmul.f32 %v208, %v280
        %v295 = vmul.f32 %v209, %v284
        %v296 = vmul.f32 %v210, %v288
        %v297 = vmul.f32 %v211, %v276
        %v298 = vmul.f32 %v212, %v280
        %v299 = vmul.f32 %v213, %v284
        %v300 = vmul.f32 %v214, %v288
        %v301 = vmul.f32 %v215, %v276
        %v302 = vmul.f32 %v216, %v280
        %v303 = vmul.f32 %v217, %v284
        %v304 = vmul.f32 %v218, %v288
        %v305 = vmul.f32 %v219, %v276
        %v306 = vmul.f32 %v220, %v280
        %v307 = vmul.f32 %v221, %v284
        %v308 = vmul.f32 %v222, %v288
        %v309 = vmul.f32 %v223, %v276
        %v310 = vmul.f32 %v224, %v280
        %v311 = vmul.f32 %v225, %v284
        %v312 = vmul.f32 %v226, %v288
        %v313 = vmul.f32 %v227, %v276
        %v314 = vmul.f32 %v228, %v280
        %v315 = vmul.f32 %v229, %v284
        %v316 = vmul.f32 %v230, %v288
        %v317 = vmul.f32 %v231, %v276
        %v318 = vmul.f32 %v232, %v280
        %v319 = vmul.f32 %v233, %v284
        %v320 = vmul.f32 %v234, %v288
        %v321 = vmul.f32 %v235, %v276
        %v322 = vmul.f32 %v236, %v280
        %v323 = vmul.f32 %v237, %v284
        %v324 = vmul.f32 %v238, %v288
        %v325 = vmul.f32 %v239, %v276
        %v326 = vmul.f32 %v240, %v280
        %v327 = vmul.f32 %v241, %v284
        %v328 = vmul.f32 %v242, %v288
        %v329 = vmul.f32 %v243, %v276
        %v330 = vmul.f32 %v244, %v280
        %v331 = vmul.f32 %v245, %v284
        %v332 = vmul.f32 %v246, %v288
        %v333 = vmul.f32 %v247, %v276
        %v334 = vmul.f32 %v248, %v280
        %v335 = vmul.f32 %v249, %v284
        %v336 = vmul.f32 %v250, %v288
        %v337 = vmul.f32 %v251, %v276
        %v338 = vmul.f32 %v252, %v280
        %v339 = vmul.f32 %v253, %v284
        %v340 = vmul.f32 %v254, %v288
        %v341 = vmul.f32 %v255, %v276
        %v342 = vmul.f32 %v256, %v280
        %v343 = vmul.f32 %v257, %v284
        %v344 = vmul.f32 %v258, %v288
        %v345 = vmul.f32 %v259, %v276
        %v346 = vmul.f32 %v260, %v280
        %v347 = vmul.f32 %v261, %v284
        %v348 = vmul.f32 %v262, %v288
        %v349 = vmul.f32 %v263, %v276
        %v350 = vmul.f32 %v264, %v280
        %v351 = vmul.f32 %v265, %v284
        %v352 = vmul.f32 %v266, %v288
        %v353 = vmul.f32 %v267, %v276
        %v354 = vmul.f32 %v268, %v280
        %v355 = vmul.f32 %v269, %v284
        %v356 = vmul.f32 %v270, %v288
        %v357 = vld [vmem:[%s2] sm:$0xf]
        %v359 = vlaneseq
        %v360 = vshrl.u32 %v359, 7
        %v361 = vsub.s32 0, %v360
        %v362 = vrot.slane %v357, %v361
        %v363 = vlaneseq
        %v364 = vshrl.u32 %v363, 7
        %v365 = vsub.s32 1, %v364
        %v366 = vrot.slane %v357, %v365
        %v367 = vlaneseq
        %v368 = vshrl.u32 %v367, 7
        %v369 = vsub.s32 2, %v368
        %v370 = vrot.slane %v357, %v369
        %v371 = vlaneseq
        %v372 = vshrl.u32 %v371, 7
        %v373 = vsub.s32 3, %v372
        %v374 = vrot.slane %v357, %v373
        %v379 = vadd.f32 %v293, %v362
        %v380 = vadd.f32 %v294, %v366
        %v381 = vadd.f32 %v295, %v370
        %v382 = vadd.f32 %v296, %v374
        %v383 = vadd.f32 %v297, %v362
        %v384 = vadd.f32 %v298, %v366
        %v385 = vadd.f32 %v299, %v370
        %v386 = vadd.f32 %v300, %v374
        %v387 = vadd.f32 %v301, %v362
        %v388 = vadd.f32 %v302, %v366
        %v389 = vadd.f32 %v303, %v370
        %v390 = vadd.f32 %v304, %v374
        %v391 = vadd.f32 %v305, %v362
        %v392 = vadd.f32 %v306, %v366
        %v393 = vadd.f32 %v307, %v370
        %v394 = vadd.f32 %v308, %v374
        %v395 = vadd.f32 %v309, %v362
        %v396 = vadd.f32 %v310, %v366
        %v397 = vadd.f32 %v311, %v370
        %v398 = vadd.f32 %v312, %v374
        %v399 = vadd.f32 %v313, %v362
        %v400 = vadd.f32 %v314, %v366
        %v401 = vadd.f32 %v315, %v370
        %v402 = vadd.f32 %v316, %v374
        %v403 = vadd.f32 %v317, %v362
        %v404 = vadd.f32 %v318, %v366
        %v405 = vadd.f32 %v319, %v370
        %v406 = vadd.f32 %v320, %v374
        %v407 = vadd.f32 %v321, %v362
        %v408 = vadd.f32 %v322, %v366
        %v409 = vadd.f32 %v323, %v370
        %v410 = vadd.f32 %v324, %v374
        %v411 = vadd.f32 %v325, %v362
        %v412 = vadd.f32 %v326, %v366
        %v413 = vadd.f32 %v327, %v370
        %v414 = vadd.f32 %v328, %v374
        %v415 = vadd.f32 %v329, %v362
        %v416 = vadd.f32 %v330, %v366
        %v417 = vadd.f32 %v331, %v370
        %v418 = vadd.f32 %v332, %v374
        %v419 = vadd.f32 %v333, %v362
        %v420 = vadd.f32 %v334, %v366
        %v421 = vadd.f32 %v335, %v370
        %v422 = vadd.f32 %v336, %v374
        %v423 = vadd.f32 %v337, %v362
        %v424 = vadd.f32 %v338, %v366
        %v425 = vadd.f32 %v339, %v370
        %v426 = vadd.f32 %v340, %v374
        %v427 = vadd.f32 %v341, %v362
        %v428 = vadd.f32 %v342, %v366
        %v429 = vadd.f32 %v343, %v370
        %v430 = vadd.f32 %v344, %v374
        %v431 = vadd.f32 %v345, %v362
        %v432 = vadd.f32 %v346, %v366
        %v433 = vadd.f32 %v347, %v370
        %v434 = vadd.f32 %v348, %v374
        %v435 = vadd.f32 %v349, %v362
        %v436 = vadd.f32 %v350, %v366
        %v437 = vadd.f32 %v351, %v370
        %v438 = vadd.f32 %v352, %v374
        %v439 = vadd.f32 %v353, %v362
        %v440 = vadd.f32 %v354, %v366
        %v441 = vadd.f32 %v355, %v370
        %v442 = vadd.f32 %v356, %v374
        %443 = vst [vmem:[%s166] sm:$0xff] %v379
        %444 = vst [vmem:[%s166 + $0x8] sm:$0xff] %v380
        %445 = vst [vmem:[%s166 + $0x10] sm:$0xff] %v381
        %446 = vst [vmem:[%s166 + $0x18] sm:$0xff] %v382
        %447 = vst [vmem:[%s166 + $0x20] sm:$0xff] %v383
        %448 = vst [vmem:[%s166 + $0x28] sm:$0xff] %v384
        %449 = vst [vmem:[%s166 + $0x30] sm:$0xff] %v385
        %450 = vst [vmem:[%s166 + $0x38] sm:$0xff] %v386
        %451 = vst [vmem:[%s166 + $0x40] sm:$0xff] %v387
        %452 = vst [vmem:[%s166 + $0x48] sm:$0xff] %v388
        %453 = vst [vmem:[%s166 + $0x50] sm:$0xff] %v389
        %454 = vst [vmem:[%s166 + $0x58] sm:$0xff] %v390
        %455 = vst [vmem:[%s166 + $0x60] sm:$0xff] %v391
        %456 = vst [vmem:[%s166 + $0x68] sm:$0xff] %v392
        %457 = vst [vmem:[%s166 + $0x70] sm:$0xff] %v393
        %458 = vst [vmem:[%s166 + $0x78] sm:$0xff] %v394
        %459 = vst [vmem:[%s166 + $0x80] sm:$0xff] %v395
        %460 = vst [vmem:[%s166 + $0x88] sm:$0xff] %v396
        %461 = vst [vmem:[%s166 + $0x90] sm:$0xff] %v397
        %462 = vst [vmem:[%s166 + $0x98] sm:$0xff] %v398
        %463 = vst [vmem:[%s166 + $0xa0] sm:$0xff] %v399
        %464 = vst [vmem:[%s166 + $0xa8] sm:$0xff] %v400
        %465 = vst [vmem:[%s166 + $0xb0] sm:$0xff] %v401
        %466 = vst [vmem:[%s166 + $0xb8] sm:$0xff] %v402
        %467 = vst [vmem:[%s166 + $0xc0] sm:$0xff] %v403
        %468 = vst [vmem:[%s166 + $0xc8] sm:$0xff] %v404
        %469 = vst [vmem:[%s166 + $0xd0] sm:$0xff] %v405
        %470 = vst [vmem:[%s166 + $0xd8] sm:$0xff] %v406
        %471 = vst [vmem:[%s166 + $0xe0] sm:$0xff] %v407
        %472 = vst [vmem:[%s166 + $0xe8] sm:$0xff] %v408
        %473 = vst [vmem:[%s166 + $0xf0] sm:$0xff] %v409
        %474 = vst [vmem:[%s166 + $0xf8] sm:$0xff] %v410
        %475 = vst [vmem:[%s166 + $0x100] sm:$0xff] %v411
        %476 = vst [vmem:[%s166 + $0x108] sm:$0xff] %v412
        %477 = vst [vmem:[%s166 + $0x110] sm:$0xff] %v413
        %478 = vst [vmem:[%s166 + $0x118] sm:$0xff] %v414
        %479 = vst [vmem:[%s166 + $0x120] sm:$0xff] %v415
        %480 = vst [vmem:[%s166 + $0x128] sm:$0xff] %v416
        %481 = vst [vmem:[%s166 + $0x130] sm:$0xff] %v417
        %482 = vst [vmem:[%s166 + $0x138] sm:$0xff] %v418
        %483 = vst [vmem:[%s166 + $0x140] sm:$0xff] %v419
        %484 = vst [vmem:[%s166 + $0x148] sm:$0xff] %v420
        %485 = vst [vmem:[%s166 + $0x150] sm:$0xff] %v421
        %486 = vst [vmem:[%s166 + $0x158] sm:$0xff] %v422
        %487 = vst [vmem:[%s166 + $0x160] sm:$0xff] %v423
        %488 = vst [vmem:[%s166 + $0x168] sm:$0xff] %v424
        %489 = vst [vmem:[%s166 + $0x170] sm:$0xff] %v425
        %490 = vst [vmem:[%s166 + $0x178] sm:$0xff] %v426
        %491 = vst [vmem:[%s166 + $0x180] sm:$0xff] %v427
        %492 = vst [vmem:[%s166 + $0x188] sm:$0xff] %v428
        %493 = vst [vmem:[%s166 + $0x190] sm:$0xff] %v429
        %494 = vst [vmem:[%s166 + $0x198] sm:$0xff] %v430
        %495 = vst [vmem:[%s166 + $0x1a0] sm:$0xff] %v431
        %496 = vst [vmem:[%s166 + $0x1a8] sm:$0xff] %v432
        %497 = vst [vmem:[%s166 + $0x1b0] sm:$0xff] %v433
        %498 = vst [vmem:[%s166 + $0x1b8] sm:$0xff] %v434
        %499 = vst [vmem:[%s166 + $0x1c0] sm:$0xff] %v435
        %500 = vst [vmem:[%s166 + $0x1c8] sm:$0xff] %v436
        %501 = vst [vmem:[%s166 + $0x1d0] sm:$0xff] %v437
        %502 = vst [vmem:[%s166 + $0x1d8] sm:$0xff] %v438
        %503 = vst [vmem:[%s166 + $0x1e0] sm:$0xff] %v439
        %504 = vst [vmem:[%s166 + $0x1e8] sm:$0xff] %v440
        %505 = vst [vmem:[%s166 + $0x1f0] sm:$0xff] %v441
        %506 = vst [vmem:[%s166 + $0x1f8] sm:$0xff] %v442
        %s507 = sand.u32 %s93, 1
        %s508 = scalar_lea.sflag [#allocation3], %s507
        %s509 = sand.u32 %s93, 1
        %s510 = smul.addr %s509, 512
        %s511 = scalar_lea.vmem [#allocation2], %s510
        // Predicated region
        $region33: #{projector_forward.5} parent=31 // pred_check
          %p512 = pneg %p103
        $region34: #{projector_forward.5} parent=31 // pred_check_branch
          %514 = sbr.rel (%p512) target = $region36
        $region35: #{projector_forward.5} parent=31 // pred_region
          %s515 = smul.u32 16, %s17
          %s517 = ssub.s32 8192, 8192
          %518 = vsyncadd %s508, %s517
          %s519 = smul.addr %s515, 4
          %s520 = smul.addr %s519, 128
          %s521 = scalar_lea.hbm %s3, %s520
          %s522 = sshll.u32 %s511, 4
          %s523 = int_to_ptr.vmem [resolvable:$true] %s522
          %528 = dma.vmem_to_hbm [thread:$0]  %s523, 8192, %s521, %s508, 512, 512, 32
        $region36: #{projector_forward.5} parent=31 // pred_fallthru
          _
      $region32: #{projector_forward.5} parent=5 // pred_fallthru
        _
      %p529 = scmp.le.s32.totalorder 2, %s12
      // Predicated region
      $region37: #{projector_forward.5} parent=5 // pred_check
        %p530 = pneg %p529
      $region38: #{projector_forward.5} parent=5 // pred_check_branch
        %532 = sbr.rel (%p530) target = $region40
      $region39: #{projector_forward.5} parent=5 // pred_region
        %s533 = ssub.s32 %s12, 2
        // Predicated region
        $region41: #{projector_forward.5} parent=39 // pred_check
          %p534 = pneg %p109
        $region42: #{projector_forward.5} parent=39 // pred_check_branch
          %536 = sbr.rel (%p534) target = $region44
        $region43: #{projector_forward.5} parent=39 // pred_region
          %s537 = sand.u32 %s94, 1
          %s538 = scalar_lea.sflag [#allocation3], %s537
          %s539 = sand.u32 %s94, 1
          %s540 = smul.addr %s539, 512
          %s541 = scalar_lea.vmem [#allocation2], %s540
          %542 = dma.done %s538, 8192
        $region44: #{projector_forward.5} parent=39 // pred_fallthru
          _
      $region40: #{projector_forward.5} parent=5 // pred_fallthru
        _
    $region6: #{projector_forward.5} parent=1 // loop_footer
      %s16 = sadd.s32 1, %s12
    $region7: #{projector_forward.5} parent=1 // loop_footer_branch
      %11 = sbr.rel target = $region3
    $region8: #{projector_forward.5} parent=1 // loop_exit
      _
    %543 = vsyncpa [#allocation3], 1
    %s544 = scalar_lea.sflag [#allocation3], 1
    %545 = vsyncpa %s544, 1

// kernel: projector_forward.3
$region0: #{projector_forward.3}
  #allocation0 [shape = 'u32[]', space=smem, size = 0x4, offset = 0x4, fixed_abs, tag = 'smem constant byte address 0x4 - core index']
  #allocation1 [shape = 'u32[144,128]{1,0:T(1,128)}', space=vmem, size = 0x12000, scoped, tag = 'internal scratch']
  %s0 = inlined_call_operand.hbm [shape: f32[256,128], index: 0, kind: input, shape index: {}]
  %s1 = inlined_call_operand.hbm [shape: bf16[128,256], index: 1, kind: input, shape index: {}]
  %s2 = inlined_call_operand.vmem [shape: f32[1,256], index: 2, kind: input, shape index: {}]
  %s3 = inlined_call_operand.vmem [shape: bf16[256,256], index: 3, kind: output, shape index: {0}]
  %s4 = inlined_call_operand.vmem [shape: f32[2,2,256], index: 4, kind: output, shape index: {1}]
  %5 = xla_tuple %s3, %s4
  %s6 = sld [smem:[#allocation0]]
  $region61: #{projector_forward.3} parent=0
    _
  %s8 = ssub.s32 1, %s6
  %s9 = scalar_select 0, %s8, %s6
  $region1: #{projector_forward.3} parent=0
    #allocation2 [shape = 'u8[131072]{0}', space=vmem, size = 0x20000, scoped, tag = 'input window, operand 0']
    #allocation3 [shape = 's32[2]{0}', space=sflag, size = 0x8, scoped, tag = 'scoped memory for projector_forward.3']
    #allocation4 [shape = 'u8[65536]{0}', space=vmem, size = 0x10000, scoped, tag = 'input window, operand 1, single buffered']
    #allocation5 [shape = 's32[1]{0}', space=sflag, size = 0x4, scoped, tag = 'scoped memory for projector_forward.3']
    %10 = vsyncpa [#allocation3], 0
    %s11 = scalar_lea.sflag [#allocation3], 1
    %12 = vsyncpa %s11, 0
    %13 = vsyncpa [#allocation5], 0
    loop: start=0, step=1, limit=4
    $region2: #{projector_forward.3} parent=1 // loop_pre_header
      _
    $region3: #{projector_forward.3} parent=1 // loop_header
      %s15 = sphi 0, %s19
      %p16 = scmp.ge.s32.totalorder %s15, 4
      %s25 = sphi 0, %s27
      %s28 = sphi 0, %s25
      %s29 = sphi 0, %s28
      %s45 = sphi 0, %s29
      %s49 = sphi 0, %s49
      %s51 = sphi 0, %s49
      %s52 = sphi 0, %s51
      %s66 = sphi 0, %s52
      %s70 = sphi 0, %s70
      %s72 = sphi 0, %s70
      %s73 = sphi 0, %s72
      %s87 = sphi 0, %s73
      %s93 = sphi 0, %s95
      %s96 = sphi 0, %s93
      %s97 = sphi 0, %s96
      %s113 = sphi 0, %s97
      %s119 = sphi 0, %s121
      %s122 = sphi 0, %s119
      %s123 = sphi 0, %s122
      %s139 = sphi 0, %s123
    $region4: #{projector_forward.3} parent=1 // loop_header_branch
      %18 = sbr.rel (%p16) target = $region8
    $region5: #{projector_forward.3} parent=1 // loop_body
      %s20 = ssub.s32 %s15, 1
      %s21 = ssub.s32 %s15, 2
      %s22 = sadd.s32 %s15, 1
      %s23 = ssub.s32 %s15, %s22
      %p24 = scmp.eq.s32.totalorder %s23, 0
      %s26 = sadd.s32 %s25, 1
      %s27 = scalar_select %p24, %s25, %s26
      %p30 = pneg %p24
      %p31 = scmp.eq.s32.totalorder %s15, 1
      %p32 = por %p30, %p31
      %p33 = scmp.ne.s32.totalorder %s25, %s28
      %p34 = scmp.eq.s32.totalorder %s15, 0
      %p35 = por %p33, %p34
      %p36 = scmp.ne.s32.totalorder %s25, %s28
      %p37 = scmp.eq.s32.totalorder %s20, 1
      %p38 = por %p36, %p37
      %p39 = scmp.ne.s32.totalorder %s28, %s29
      %p40 = scmp.eq.s32.totalorder %s20, 0
      %p41 = por %p39, %p40
      %p42 = scmp.ne.s32.totalorder %s28, %s29
      %p43 = scmp.eq.s32.totalorder %s21, 1
      %p44 = por %p42, %p43
      %p46 = scmp.ne.s32.totalorder %s29, %s45
      %p47 = scmp.eq.s32.totalorder %s21, 0
      %p48 = por %p46, %p47
      %s50 = sadd.s32 %s49, 1
      %p53 = scmp.eq.s32.totalorder %s15, 1
      %p54 = scmp.ne.s32.totalorder %s49, %s51
      %p55 = scmp.eq.s32.totalorder %s15, 0
      %p56 = por %p54, %p55
      %p57 = scmp.ne.s32.totalorder %s49, %s51
      %p58 = scmp.eq.s32.totalorder %s20, 1
      %p59 = por %p57, %p58
      %p60 = scmp.ne.s32.totalorder %s51, %s52
      %p61 = scmp.eq.s32.totalorder %s20, 0
      %p62 = por %p60, %p61
      %p63 = scmp.ne.s32.totalorder %s51, %s52
      %p64 = scmp.eq.s32.totalorder %s21, 1
      %p65 = por %p63, %p64
      %p67 = scmp.ne.s32.totalorder %s52, %s66
      %p68 = scmp.eq.s32.totalorder %s21, 0
      %p69 = por %p67, %p68
      %s71 = sadd.s32 %s70, 1
      %p74 = scmp.eq.s32.totalorder %s15, 1
      %p75 = scmp.ne.s32.totalorder %s70, %s72
      %p76 = scmp.eq.s32.totalorder %s15, 0
      %p77 = por %p75, %p76
      %p78 = scmp.ne.s32.totalorder %s70, %s72
      %p79 = scmp.eq.s32.totalorder %s20, 1
      %p80 = por %p78, %p79
      %p81 = scmp.ne.s32.totalorder %s72, %s73
      %p82 = scmp.eq.s32.totalorder %s20, 0
      %p83 = por %p81, %p82
      %p84 = scmp.ne.s32.totalorder %s72, %s73
      %p85 = scmp.eq.s32.totalorder %s21, 1
      %p86 = por %p84, %p85
      %p88 = scmp.ne.s32.totalorder %s73, %s87
      %p89 = scmp.eq.s32.totalorder %s21, 0
      %p90 = por %p88, %p89
      %s91 = ssub.s32 %s15, %s22
      %p92 = scmp.eq.s32.totalorder %s91, 0
      %s94 = sadd.s32 %s93, 1
      %s95 = scalar_select %p92, %s93, %s94
      %p98 = pneg %p92
      %p99 = scmp.eq.s32.totalorder %s15, 1
      %p100 = por %p98, %p99
      %p101 = scmp.ne.s32.totalorder %s93, %s96
      %p102 = scmp.eq.s32.totalorder %s15, 0
      %p103 = por %p101, %p102
      %p104 = scmp.ne.s32.totalorder %s93, %s96
      %p105 = scmp.eq.s32.totalorder %s20, 1
      %p106 = por %p104, %p105
      %p107 = scmp.ne.s32.totalorder %s96, %s97
      %p108 = scmp.eq.s32.totalorder %s20, 0
      %p109 = por %p107, %p108
      %p110 = scmp.ne.s32.totalorder %s96, %s97
      %p111 = scmp.eq.s32.totalorder %s21, 1
      %p112 = por %p110, %p111
      %p114 = scmp.ne.s32.totalorder %s97, %s113
      %p115 = scmp.eq.s32.totalorder %s21, 0
      %p116 = por %p114, %p115
      %s117 = ssub.s32 %s15, %s22
      %p118 = scmp.eq.s32.totalorder %s117, 0
      %s120 = sadd.s32 %s119, 1
      %s121 = scalar_select %p118, %s119, %s120
      %p124 = pneg %p118
      %p125 = scmp.eq.s32.totalorder %s15, 1
      %p126 = por %p124, %p125
      %p127 = scmp.ne.s32.totalorder %s119, %s122
      %p128 = scmp.eq.s32.totalorder %s15, 0
      %p129 = por %p127, %p128
      %p130 = scmp.ne.s32.totalorder %s119, %s122
      %p131 = scmp.eq.s32.totalorder %s20, 1
      %p132 = por %p130, %p131
      %p133 = scmp.ne.s32.totalorder %s122, %s123
      %p134 = scmp.eq.s32.totalorder %s20, 0
      %p135 = por %p133, %p134
      %p136 = scmp.ne.s32.totalorder %s122, %s123
      %p137 = scmp.eq.s32.totalorder %s21, 1
      %p138 = por %p136, %p137
      %p140 = scmp.ne.s32.totalorder %s123, %s139
      %p141 = scmp.eq.s32.totalorder %s21, 0
      %p142 = por %p140, %p141
      %p143 = scmp.le.s32.totalorder 1, %s15
      %p144 = scmp.lt.s32.totalorder %s15, 3
      %p145 = pnand %p143, %p144
      %p146 = pneg %p145
      // Predicated region
      $region9: #{projector_forward.3} parent=5 // pred_check
        _
      $region10: #{projector_forward.3} parent=5 // pred_check_branch
        %148 = sbr.rel (%p145) target = $region12
      $region11: #{projector_forward.3} parent=5 // pred_region
        %s149 = ssub.s32 %s15, 1
        // Predicated region
        $region13: #{projector_forward.3} parent=11 // pred_check
          %p150 = pneg %p62
        $region14: #{projector_forward.3} parent=11 // pred_check_branch
          %152 = sbr.rel (%p150) target = $region16
        $region15: #{projector_forward.3} parent=11 // pred_region
          %s154 = ssub.s32 2048, 2048
          %155 = vsyncadd [#allocation5], %s154
          %s156 = sshll.u32 [#allocation4], 4
          %s157 = int_to_ptr.vmem [resolvable:$true] %s156
          %162 = dma.hbm_to_vmem [thread:$0]  %s1, 2048, %s157, [#allocation5], 128, 128, 8
        $region16: #{projector_forward.3} parent=11 // pred_fallthru
          _
        // Predicated region
        $region17: #{projector_forward.3} parent=11 // pred_check
          %p163 = pneg %p83
        $region18: #{projector_forward.3} parent=11 // pred_check_branch
          %165 = sbr.rel (%p163) target = $region20
        $region19: #{projector_forward.3} parent=11 // pred_region
          _
        $region20: #{projector_forward.3} parent=11 // pred_fallthru
          _
      $region12: #{projector_forward.3} parent=5 // pred_fallthru
        _
      %p166 = scmp.lt.s32.totalorder %s15, 2
      // Predicated region
      $region21: #{projector_forward.3} parent=5 // pred_check
        %p167 = pneg %p166
      $region22: #{projector_forward.3} parent=5 // pred_check_branch
        %169 = sbr.rel (%p167) target = $region24
      $region23: #{projector_forward.3} parent=5 // pred_region
        // Predicated region
        $region25: #{projector_forward.3} parent=23 // pred_check
          %p170 = pneg %p35
        $region26: #{projector_forward.3} parent=23 // pred_check_branch
          %172 = sbr.rel (%p170) target = $region28
        $region27: #{projector_forward.3} parent=23 // pred_region
          %s173 = sand.u32 %s25, 1
          %s174 = scalar_lea.sflag [#allocation3], %s173
          %s175 = sand.u32 %s25, 1
          %s176 = smul.addr %s175, 128
          %s177 = scalar_lea.vmem [#allocation2], %s176
          %s178 = smul.u32 16, %s15
          %s180 = ssub.s32 2048, 2048
          %181 = vsyncadd %s174, %s180
          %s182 = smul.addr %s178, 128
          %s183 = scalar_lea.hbm %s0, %s182
          %s184 = sshll.u32 %s177, 4
          %s185 = int_to_ptr.vmem [resolvable:$true] %s184
          %190 = dma.hbm_to_vmem [thread:$0]  %s183, 2048, %s185, %s174, 128, 128, 8
        $region28: #{projector_forward.3} parent=23 // pred_fallthru
          _
      $region24: #{projector_forward.3} parent=5 // pred_fallthru
        _
      %p191 = scmp.le.s32.totalorder 1, %s15
      %p192 = scmp.lt.s32.totalorder %s15, 3
      %p193 = pnand %p191, %p192
      %p194 = pneg %p193
      // Predicated region
      $region29: #{projector_forward.3} parent=5 // pred_check
        _
      $region30: #{projector_forward.3} parent=5 // pred_check_branch
        %196 = sbr.rel (%p193) target = $region32
      $region31: #{projector_forward.3} parent=5 // pred_region
        %s197 = ssub.s32 %s15, 1
        %s198 = sand.u32 %s28, 1
        %s199 = scalar_lea.sflag [#allocation3], %s198
        %s200 = sand.u32 %s28, 1
        %s201 = smul.addr %s200, 128
        %s202 = scalar_lea.vmem [#allocation2], %s201
        // Predicated region
        $region33: #{projector_forward.3} parent=31 // pred_check
          %p203 = pneg %p41
        $region34: #{projector_forward.3} parent=31 // pred_check_branch
          %205 = sbr.rel (%p203) target = $region36
        $region35: #{projector_forward.3} parent=31 // pred_region
          %206 = dma.done %s199, 2048
        $region36: #{projector_forward.3} parent=31 // pred_fallthru
          _
        // Predicated region
        $region37: #{projector_forward.3} parent=31 // pred_check
          %p207 = pneg %p62
        $region38: #{projector_forward.3} parent=31 // pred_check_branch
          %209 = sbr.rel (%p207) target = $region40
        $region39: #{projector_forward.3} parent=31 // pred_region
          %210 = dma.done [#allocation5], 2048
        $region40: #{projector_forward.3} parent=31 // pred_fallthru
          _
        %s211 = sand.u32 %s28, 1
        %s212 = scalar_lea.sflag [#allocation3], %s211
        %s213 = sand.u32 %s28, 1
        %s214 = smul.addr %s213, 128
        %s215 = scalar_lea.vmem [#allocation2], %s214
        %p216 = pneg %p41
        %p217 = pneg %p38
        %p218 = pneg %p62
        %p219 = pneg %p59
        %p220 = pneg %p83
        %p221 = pneg %p80
        %p222 = pneg %p109
        %p223 = pneg %p106
        %s224 = smul.u32 16, %s20
        %p225 = scmp.lt.s32.totalorder %s224, 31
        %s226 = scalar_select %p225, %s224, 31
        %s227 = smul.addr %s226, 2
        %s228 = smul.addr %s227, 4
        %s229 = scalar_lea.vmem %s3, %s228
        %p230 = pneg %p135
        %p231 = pneg %p132
        %p232 = scmp.lt.s32.totalorder %s20, 1
        %s233 = scalar_select %p232, %s20, 1
        %s234 = smul.addr %s233, 2
        %s235 = smul.addr %s234, 2
        %s236 = scalar_lea.vmem %s4, %s235
        %s237 = smul.u32 16, %s20
        %s238 = smul.u32 16, %s20
        %p239 = scmp.lt.s32.totalorder %s238, 31
        %s240 = scalar_select %p239, %s238, 31
        %s241 = smul.addr %s240, 2
        %s242 = smul.addr %s241, 4
        %s243 = scalar_lea.vmem %s3, %s242
        %s244 = smul.u32 16, %s20
        %p245 = scmp.lt.s32.totalorder %s20, 1
        %s246 = scalar_select %p245, %s20, 1
        %s247 = smul.addr %s246, 2
        %s248 = smul.addr %s247, 2
        %s249 = scalar_lea.vmem %s4, %s248
        %v251 = vld [vmem:[%s202] sm:$0xff]
        %v252 = vld [vmem:[%s202 + $0x8] sm:$0xff]
        %v253 = vld [vmem:[%s202 + $0x10] sm:$0xff]
        %v254 = vld [vmem:[%s202 + $0x18] sm:$0xff]
        %v255 = vld [vmem:[%s202 + $0x20] sm:$0xff]
        %v256 = vld [vmem:[%s202 + $0x28] sm:$0xff]
        %v257 = vld [vmem:[%s202 + $0x30] sm:$0xff]
        %v258 = vld [vmem:[%s202 + $0x38] sm:$0xff]
        %v259 = vld [vmem:[%s202 + $0x40] sm:$0xff]
        %v260 = vld [vmem:[%s202 + $0x48] sm:$0xff]
        %v261 = vld [vmem:[%s202 + $0x50] sm:$0xff]
        %v262 = vld [vmem:[%s202 + $0x58] sm:$0xff]
        %v263 = vld [vmem:[%s202 + $0x60] sm:$0xff]
        %v264 = vld [vmem:[%s202 + $0x68] sm:$0xff]
        %v265 = vld [vmem:[%s202 + $0x70] sm:$0xff]
        %v266 = vld [vmem:[%s202 + $0x78] sm:$0xff]
        %v267 = vpack.c.bf16 %v252, %v251
        %v268 = vpack.c.bf16 %v254, %v253
        %v269 = vpack.c.bf16 %v256, %v255
        %v270 = vpack.c.bf16 %v258, %v257
        %v271 = vpack.c.bf16 %v260, %v259
        %v272 = vpack.c.bf16 %v262, %v261
        %v273 = vpack.c.bf16 %v264, %v263
        %v274 = vpack.c.bf16 %v266, %v265
        %v275 = vld [vmem:[#allocation4] sm:$0xff]
        %v276 = vld [vmem:[#allocation4 + $0x8] sm:$0xff]
        %v277 = vld [vmem:[#allocation4 + $0x10] sm:$0xff]
        %v278 = vld [vmem:[#allocation4 + $0x18] sm:$0xff]
        %v279 = vld [vmem:[#allocation4 + $0x20] sm:$0xff]
        %v280 = vld [vmem:[#allocation4 + $0x28] sm:$0xff]
        %v281 = vld [vmem:[#allocation4 + $0x30] sm:$0xff]
        %v282 = vld [vmem:[#allocation4 + $0x38] sm:$0xff]
        %v283 = vld [vmem:[#allocation4 + $0x40] sm:$0xff]
        %v284 = vld [vmem:[#allocation4 + $0x48] sm:$0xff]
        %v285 = vld [vmem:[#allocation4 + $0x50] sm:$0xff]
        %v286 = vld [vmem:[#allocation4 + $0x58] sm:$0xff]
        %v287 = vld [vmem:[#allocation4 + $0x60] sm:$0xff]
        %v288 = vld [vmem:[#allocation4 + $0x68] sm:$0xff]
        %v289 = vld [vmem:[#allocation4 + $0x70] sm:$0xff]
        %v290 = vld [vmem:[#allocation4 + $0x78] sm:$0xff]
        %v291 = vld [vmem:[%s2] sm:$0x3]
        %v293 = vlaneseq
        %v294 = vshrl.u32 %v293, 7
        %v295 = vsub.s32 0, %v294
        %v296 = vrot.slane %v291, %v295
        %v297 = vlaneseq
        %v298 = vshrl.u32 %v297, 7
        %v299 = vsub.s32 1, %v298
        %v300 = vrot.slane %v291, %v299
        %v319 = vunpack.c.l.b16 %v275
        %v320 = vunpack.c.h.b16 %v275
        %v321 = vunpack.c.l.b16 %v276
        %v322 = vunpack.c.h.b16 %v276
        %v323 = vunpack.c.l.b16 %v277
        %v324 = vunpack.c.h.b16 %v277
        %v325 = vunpack.c.l.b16 %v278
        %v326 = vunpack.c.h.b16 %v278
        %v327 = vunpack.c.l.b16 %v279
        %v328 = vunpack.c.h.b16 %v279
        %v329 = vunpack.c.l.b16 %v280
        %v330 = vunpack.c.h.b16 %v280
        %v331 = vunpack.c.l.b16 %v281
        %v332 = vunpack.c.h.b16 %v281
        %v333 = vunpack.c.l.b16 %v282
        %v334 = vunpack.c.h.b16 %v282
        %v335 = vunpack.c.l.b16 %v283
        %v336 = vunpack.c.h.b16 %v283
        %v337 = vunpack.c.l.b16 %v284
        %v338 = vunpack.c.h.b16 %v284
        %v339 = vunpack.c.l.b16 %v285
        %v340 = vunpack.c.h.b16 %v285
        %v341 = vunpack.c.l.b16 %v286
        %v342 = vunpack.c.h.b16 %v286
        %v343 = vunpack.c.l.b16 %v287
        %v344 = vunpack.c.h.b16 %v287
        %v345 = vunpack.c.l.b16 %v288
        %v346 = vunpack.c.h.b16 %v288
        %v347 = vunpack.c.l.b16 %v289
        %v348 = vunpack.c.h.b16 %v289
        %v349 = vunpack.c.l.b16 %v290
        %v350 = vunpack.c.h.b16 %v290
        %v351 = vpack.c.b16 %v321, %v319
        %v352 = vpack.c.b16 %v322, %v320
        %v353 = vpack.c.b16 %v325, %v323
        %v354 = vpack.c.b16 %v326, %v324
        %v355 = vpack.c.b16 %v329, %v327
        %v356 = vpack.c.b16 %v330, %v328
        %v357 = vpack.c.b16 %v333, %v331
        %v358 = vpack.c.b16 %v334, %v332
        %v359 = vpack.c.b16 %v337, %v335
        %v360 = vpack.c.b16 %v338, %v336
        %v361 = vpack.c.b16 %v341, %v339
        %v362 = vpack.c.b16 %v342, %v340
        %v363 = vpack.c.b16 %v345, %v343
        %v364 = vpack.c.b16 %v346, %v344
        %v365 = vpack.c.b16 %v349, %v347
        %v366 = vpack.c.b16 %v350, %v348
        %383 = vmatprep.subr.bf16.mxu0 %v352
        %384 = vmatpush1.bf16.msra.mxu0 %v351
        %385 = vmatprep.subr.bf16.mxu0 %v354
        %386 = vmatpush1.bf16.msra.mxu0 %v353
        %387 = vmatprep.subr.bf16.mxu0 %v356
        %388 = vmatpush1.bf16.msra.mxu0 %v355
        %389 = vmatprep.subr.bf16.mxu0 %v358
        %390 = vmatpush1.bf16.msra.mxu0 %v357
        %391 = vmatprep.subr.bf16.mxu0 %v360
        %392 = vmatpush1.bf16.msra.mxu0 %v359
        %393 = vmatprep.subr.bf16.mxu0 %v362
        %394 = vmatpush1.bf16.msra.mxu0 %v361
        %395 = vmatprep.subr.bf16.mxu0 %v364
        %396 = vmatpush1.bf16.msra.mxu0 %v363
        %397 = vmatprep.subr.bf16.mxu0 %v366
        %398 = vmatpush1.bf16.msra.mxu0 %v365
        %399 = vmatprep.subr.bf16.mxu0 0
        %400 = vmatpush1.bf16.msra.mxu0 0
        %401 = vmatprep.subr.bf16.mxu0 0
        %402 = vmatpush1.bf16.msra.mxu0 0
        %403 = vmatprep.subr.bf16.mxu0 0
        %404 = vmatpush1.bf16.msra.mxu0 0
        %405 = vmatprep.subr.bf16.mxu0 0
        %406 = vmatpush1.bf16.msra.mxu0 0
        %407 = vmatprep.subr.bf16.mxu0 0
        %408 = vmatpush1.bf16.msra.mxu0 0
        %409 = vmatprep.subr.bf16.mxu0 0
        %410 = vmatpush1.bf16.msra.mxu0 0
        %411 = vmatprep.subr.bf16.mxu0 0
        %412 = vmatpush1.bf16.msra.mxu0 0
        %413 = vmatprep.subr.bf16.mxu0 0
        %414 = vmatpush1.bf16.msra.mxu0 0
        %415 = vmatprep.mubr.bf16.mxu0 0
        %416 = vmatmul.mubr.bf16.gmra.mrb[0].mxu0 %v267
        %v417 = vpop.f32.mrb[0].mxu0
        %v418 = vadd.f32 %v296, %v417
        %v419 = vpop.f32.mrb[0].mxu0
        %v420 = vadd.f32 %v300, %v419
        %v421 = vpop.f32.mrb[0].mxu0
        %v422 = vadd.f32 %v296, %v421
        %v423 = vpop.f32.mrb[0].mxu0
        %v424 = vadd.f32 %v300, %v423
        %425 = vmatprep.mubr.bf16.mxu0 0
        %426 = vmatmul.mubr.bf16.gmra.mrb[0].mxu0 %v268
        %v427 = vpop.f32.mrb[0].mxu0
        %v428 = vadd.f32 %v296, %v427
        %v429 = vpop.f32.mrb[0].mxu0
        %v430 = vadd.f32 %v300, %v429
        %v431 = vpop.f32.mrb[0].mxu0
        %v432 = vadd.f32 %v296, %v431
        %v433 = vpop.f32.mrb[0].mxu0
        %v434 = vadd.f32 %v300, %v433
        %435 = vmatprep.mubr.bf16.mxu0 0
        %436 = vmatmul.mubr.bf16.gmra.mrb[0].mxu0 %v269
        %v437 = vpop.f32.mrb[0].mxu0
        %v438 = vadd.f32 %v296, %v437
        %v439 = vpop.f32.mrb[0].mxu0
        %v440 = vadd.f32 %v300, %v439
        %v441 = vpop.f32.mrb[0].mxu0
        %v442 = vadd.f32 %v296, %v441
        %v443 = vpop.f32.mrb[0].mxu0
        %v444 = vadd.f32 %v300, %v443
        %445 = vmatprep.mubr.bf16.mxu0 0
        %446 = vmatmul.mubr.bf16.gmra.mrb[0].mxu0 %v270
        %v447 = vpop.f32.mrb[0].mxu0
        %v448 = vadd.f32 %v296, %v447
        %v449 = vpop.f32.mrb[0].mxu0
        %v450 = vadd.f32 %v300, %v449
        %v451 = vpop.f32.mrb[0].mxu0
        %v452 = vadd.f32 %v296, %v451
        %v453 = vpop.f32.mrb[0].mxu0
        %v454 = vadd.f32 %v300, %v453
        %455 = vmatprep.mubr.bf16.mxu0 0
        %456 = vmatmul.mubr.bf16.gmra.mrb[0].mxu0 %v271
        %v457 = vpop.f32.mrb[0].mxu0
        %v458 = vadd.f32 %v296, %v457
        %v459 = vpop.f32.mrb[0].mxu0
        %v460 = vadd.f32 %v300, %v459
        %v461 = vpop.f32.mrb[0].mxu0
        %v462 = vadd.f32 %v296, %v461
        %v463 = vpop.f32.mrb[0].mxu0
        %v464 = vadd.f32 %v300, %v463
        %465 = vmatprep.mubr.bf16.mxu0 0
        %466 = vmatmul.mubr.bf16.gmra.mrb[0].mxu0 %v272
        %v467 = vpop.f32.mrb[0].mxu0
        %v468 = vadd.f32 %v296, %v467
        %v469 = vpop.f32.mrb[0].mxu0
        %v470 = vadd.f32 %v300, %v469
        %v471 = vpop.f32.mrb[0].mxu0
        %v472 = vadd.f32 %v296, %v471
        %v473 = vpop.f32.mrb[0].mxu0
        %v474 = vadd.f32 %v300, %v473
        %475 = vmatprep.mubr.bf16.mxu0 0
        %476 = vmatmul.mubr.bf16.gmra.mrb[0].mxu0 %v273
        %v477 = vpop.f32.mrb[0].mxu0
        %v478 = vadd.f32 %v296, %v477
        %v479 = vpop.f32.mrb[0].mxu0
        %v480 = vadd.f32 %v300, %v479
        %v481 = vpop.f32.mrb[0].mxu0
        %v482 = vadd.f32 %v296, %v481
        %v483 = vpop.f32.mrb[0].mxu0
        %v484 = vadd.f32 %v300, %v483
        %485 = vmatprep.mubr.bf16.mxu0 0
        %486 = vmatmul.mubr.bf16.gmra.mrb[0].mxu0 %v274
        %v487 = vpop.f32.mrb[0].mxu0
        %v488 = vadd.f32 %v296, %v487
        %v489 = vpop.f32.mrb[0].mxu0
        %v490 = vadd.f32 %v300, %v489
        %v491 = vpop.f32.mrb[0].mxu0
        %v492 = vadd.f32 %v296, %v491
        %v493 = vpop.f32.mrb[0].mxu0
        %v494 = vadd.f32 %v300, %v493
        %495 = vdwg.mxu0
        %v496 = vadd.f32 %v418, %v422
        %v497 = vadd.f32 %v496, %v428
        %v498 = vadd.f32 %v497, %v432
        %v499 = vadd.f32 %v498, %v438
        %v500 = vadd.f32 %v499, %v442
        %v501 = vadd.f32 %v500, %v448
        %v502 = vadd.f32 %v501, %v452
        %v503 = vadd.f32 %v502, %v458
        %v504 = vadd.f32 %v503, %v462
        %v505 = vadd.f32 %v504, %v468
        %v506 = vadd.f32 %v505, %v472
        %v507 = vadd.f32 %v506, %v478
        %v508 = vadd.f32 %v507, %v482
        %v509 = vadd.f32 %v508, %v488
        %v510 = vadd.f32 %v509, %v492
        %v511 = vrot.slane %v510, 4
        %v512 = vadd.f32 %v510, %v511
        %v513 = vrot.slane %v512, 2
        %v514 = vadd.f32 %v512, %v513
        %v515 = vrot.slane %v514, 1
        %v516 = vadd.f32 %v514, %v515
        %v517 = vadd.f32 %v420, %v424
        %v518 = vadd.f32 %v517, %v430
        %v519 = vadd.f32 %v518, %v434
        %v520 = vadd.f32 %v519, %v440
        %v521 = vadd.f32 %v520, %v444
        %v522 = vadd.f32 %v521, %v450
        %v523 = vadd.f32 %v522, %v454
        %v524 = vadd.f32 %v523, %v460
        %v525 = vadd.f32 %v524, %v464
        %v526 = vadd.f32 %v525, %v470
        %v527 = vadd.f32 %v526, %v474
        %v528 = vadd.f32 %v527, %v480
        %v529 = vadd.f32 %v528, %v484
        %v530 = vadd.f32 %v529, %v490
        %v531 = vadd.f32 %v530, %v494
        %v532 = vrot.slane %v531, 4
        %v533 = vadd.f32 %v531, %v532
        %v534 = vrot.slane %v533, 2
        %v535 = vadd.f32 %v533, %v534
        %v536 = vrot.slane %v535, 1
        %v537 = vadd.f32 %v535, %v536
        %v540 = vcombine.low %v516, %v537
        %v542 = vunpack.c.l.s4 1966171168
        %v543 = vunpack.c.0.s8 %v542
        %v544 = vlaneseq
        %v545 = vshrl.u32 %v544, 7
        %v546 = vsub.s32 %v543, %v545
        %v547 = vrot.slane %v540, %v546
        %v549 = vunpack.c.l.s4 1966171168
        %v550 = vunpack.c.0.s8 %v549
        %v551 = vlaneseq
        %v552 = vshrl.u32 %v551, 7
        %v553 = vsub.s32 %v550, %v552
        %v554 = vrot.slane %v547, %v553
        %v556 = vlaneseq
        %vm557 = vcmp.ge.s32.totalorder %v556, 0
        %vm558 = vcmp.lt.s32.totalorder %v556, 256
        %vm559 = vmand %vm557, %vm558
        %560 = vst.msk [vmem:[%s249] ss:$2 sm:$0x3] %vm559, %v554
        %v561 = vmul.f32 %v418, %v418
        %v562 = vmul.f32 %v420, %v420
        %v563 = vmul.f32 %v422, %v422
        %v564 = vmul.f32 %v424, %v424
        %v565 = vmul.f32 %v428, %v428
        %v566 = vmul.f32 %v430, %v430
        %v567 = vmul.f32 %v432, %v432
        %v568 = vmul.f32 %v434, %v434
        %v569 = vmul.f32 %v438, %v438
        %v570 = vmul.f32 %v440, %v440
        %v571 = vmul.f32 %v442, %v442
        %v572 = vmul.f32 %v444, %v444
        %v573 = vmul.f32 %v448, %v448
        %v574 = vmul.f32 %v450, %v450
        %v575 = vmul.f32 %v452, %v452
        %v576 = vmul.f32 %v454, %v454
        %v577 = vmul.f32 %v458, %v458
        %v578 = vmul.f32 %v460, %v460
        %v579 = vmul.f32 %v462, %v462
        %v580 = vmul.f32 %v464, %v464
        %v581 = vmul.f32 %v468, %v468
        %v582 = vmul.f32 %v470, %v470
        %v583 = vmul.f32 %v472, %v472
        %v584 = vmul.f32 %v474, %v474
        %v585 = vmul.f32 %v478, %v478
        %v586 = vmul.f32 %v480, %v480
        %v587 = vmul.f32 %v482, %v482
        %v588 = vmul.f32 %v484, %v484
        %v589 = vmul.f32 %v488, %v488
        %v590 = vmul.f32 %v490, %v490
        %v591 = vmul.f32 %v492, %v492
        %v592 = vmul.f32 %v494, %v494
        %v593 = vadd.f32 %v561, %v563
        %v594 = vadd.f32 %v593, %v565
        %v595 = vadd.f32 %v594, %v567
        %v596 = vadd.f32 %v595, %v569
        %v597 = vadd.f32 %v596, %v571
        %v598 = vadd.f32 %v597, %v573
        %v599 = vadd.f32 %v598, %v575
        %v600 = vadd.f32 %v599, %v577
        %v601 = vadd.f32 %v600, %v579
        %v602 = vadd.f32 %v601, %v581
        %v603 = vadd.f32 %v602, %v583
        %v604 = vadd.f32 %v603, %v585
        %v605 = vadd.f32 %v604, %v587
        %v606 = vadd.f32 %v605, %v589
        %v607 = vadd.f32 %v606, %v591
        %v608 = vrot.slane %v607, 4
        %v609 = vadd.f32 %v607, %v608
        %v610 = vrot.slane %v609, 2
        %v611 = vadd.f32 %v609, %v610
        %v612 = vrot.slane %v611, 1
        %v613 = vadd.f32 %v611, %v612
        %v614 = vadd.f32 %v562, %v564
        %v615 = vadd.f32 %v614, %v566
        %v616 = vadd.f32 %v615, %v568
        %v617 = vadd.f32 %v616, %v570
        %v618 = vadd.f32 %v617, %v572
        %v619 = vadd.f32 %v618, %v574
        %v620 = vadd.f32 %v619, %v576
        %v621 = vadd.f32 %v620, %v578
        %v622 = vadd.f32 %v621, %v580
        %v623 = vadd.f32 %v622, %v582
        %v624 = vadd.f32 %v623, %v584
        %v625 = vadd.f32 %v624, %v586
        %v626 = vadd.f32 %v625, %v588
        %v627 = vadd.f32 %v626, %v590
        %v628 = vadd.f32 %v627, %v592
        %v629 = vrot.slane %v628, 4
        %v630 = vadd.f32 %v628, %v629
        %v631 = vrot.slane %v630, 2
        %v632 = vadd.f32 %v630, %v631
        %v633 = vrot.slane %v632, 1
        %v634 = vadd.f32 %v632, %v633
        %v637 = vcombine.low %v613, %v634
        %v639 = vunpack.c.l.s4 1966171168
        %v640 = vunpack.c.0.s8 %v639
        %v641 = vlaneseq
        %v642 = vshrl.u32 %v641, 7
        %v643 = vsub.s32 %v640, %v642
        %v644 = vrot.slane %v637, %v643
        %v646 = vunpack.c.l.s4 1966171168
        %v647 = vunpack.c.0.s8 %v646
        %v648 = vlaneseq
        %v649 = vshrl.u32 %v648, 7
        %v650 = vsub.s32 %v647, %v649
        %v651 = vrot.slane %v644, %v650
        %s653 = scalar_lea.vmem %s249, 1
        %654 = vst.msk [vmem:[%s653] ss:$2 sm:$0x3] %vm559, %v651
        %v655 = vpack.c.bf16 %v422, %v418
        %v656 = vpack.c.bf16 %v424, %v420
        %v657 = vpack.c.bf16 %v432, %v428
        %v658 = vpack.c.bf16 %v434, %v430
        %v659 = vpack.c.bf16 %v442, %v438
        %v660 = vpack.c.bf16 %v444, %v440
        %v661 = vpack.c.bf16 %v452, %v448
        %v662 = vpack.c.bf16 %v454, %v450
        %v663 = vpack.c.bf16 %v462, %v458
        %v664 = vpack.c.bf16 %v464, %v460
        %v665 = vpack.c.bf16 %v472, %v468
        %v666 = vpack.c.bf16 %v474, %v470
        %v667 = vpack.c.bf16 %v482, %v478
        %v668 = vpack.c.bf16 %v484, %v480
        %v669 = vpack.c.bf16 %v492, %v488
        %v670 = vpack.c.bf16 %v494, %v490
        %v687 = vunpack.c.l.b16 %v655
        %v688 = vunpack.c.l.b16 %v656
        %v689 = vunpack.c.h.b16 %v655
        %v690 = vunpack.c.h.b16 %v656
        %v691 = vunpack.c.l.b16 %v657
        %v692 = vunpack.c.l.b16 %v658
        %v693 = vunpack.c.h.b16 %v657
        %v694 = vunpack.c.h.b16 %v658
        %v695 = vunpack.c.l.b16 %v659
        %v696 = vunpack.c.l.b16 %v660
        %v697 = vunpack.c.h.b16 %v659
        %v698 = vunpack.c.h.b16 %v660
        %v699 = vunpack.c.l.b16 %v661
        %v700 = vunpack.c.l.b16 %v662
        %v701 = vunpack.c.h.b16 %v661
        %v702 = vunpack.c.h.b16 %v662
        %v703 = vunpack.c.l.b16 %v663
        %v704 = vunpack.c.l.b16 %v664
        %v705 = vunpack.c.h.b16 %v663
        %v706 = vunpack.c.h.b16 %v664
        %v707 = vunpack.c.l.b16 %v665
        %v708 = vunpack.c.l.b16 %v666
        %v709 = vunpack.c.h.b16 %v665
        %v710 = vunpack.c.h.b16 %v666
        %v711 = vunpack.c.l.b16 %v667
        %v712 = vunpack.c.l.b16 %v668
        %v713 = vunpack.c.h.b16 %v667
        %v714 = vunpack.c.h.b16 %v668
        %v715 = vunpack.c.l.b16 %v669
        %v716 = vunpack.c.l.b16 %v670
        %v717 = vunpack.c.h.b16 %v669
        %v718 = vunpack.c.h.b16 %v670
        %v719 = vpack.c.b16 %v688, %v687
        %v720 = vpack.c.b16 %v690, %v689
        %v721 = vpack.c.b16 %v692, %v691
        %v722 = vpack.c.b16 %v694, %v693
        %v723 = vpack.c.b16 %v696, %v695
        %v724 = vpack.c.b16 %v698, %v697
        %v725 = vpack.c.b16 %v700, %v699
        %v726 = vpack.c.b16 %v702, %v701
        %v727 = vpack.c.b16 %v704, %v703
        %v728 = vpack.c.b16 %v706, %v705
        %v729 = vpack.c.b16 %v708, %v707
        %v730 = vpack.c.b16 %v710, %v709
        %v731 = vpack.c.b16 %v712, %v711
        %v732 = vpack.c.b16 %v714, %v713
        %v733 = vpack.c.b16 %v716, %v715
        %v734 = vpack.c.b16 %v718, %v717
        %751 = vst [vmem:[%s243] sm:$0xff] %v719
        %752 = vst [vmem:[%s243 + $0x8] sm:$0xff] %v720
        %753 = vst [vmem:[%s243 + $0x10] sm:$0xff] %v721
        %754 = vst [vmem:[%s243 + $0x18] sm:$0xff] %v722
        %755 = vst [vmem:[%s243 + $0x20] sm:$0xff] %v723
        %756 = vst [vmem:[%s243 + $0x28] sm:$0xff] %v724
        %757 = vst [vmem:[%s243 + $0x30] sm:$0xff] %v725
        %758 = vst [vmem:[%s243 + $0x38] sm:$0xff] %v726
        %759 = vst [vmem:[%s243 + $0x40] sm:$0xff] %v727
        %760 = vst [vmem:[%s243 + $0x48] sm:$0xff] %v728
        %761 = vst [vmem:[%s243 + $0x50] sm:$0xff] %v729
        %762 = vst [vmem:[%s243 + $0x58] sm:$0xff] %v730
        %763 = vst [vmem:[%s243 + $0x60] sm:$0xff] %v731
        %764 = vst [vmem:[%s243 + $0x68] sm:$0xff] %v732
        %765 = vst [vmem:[%s243 + $0x70] sm:$0xff] %v733
        %766 = vst [vmem:[%s243 + $0x78] sm:$0xff] %v734
        %s767 = smul.u32 16, %s20
        %p768 = scmp.lt.s32.totalorder %s767, 31
        %s769 = scalar_select %p768, %s767, 31
        %s770 = smul.addr %s769, 2
        %s771 = smul.addr %s770, 4
        %s772 = scalar_lea.vmem %s3, %s771
        %p773 = scmp.lt.s32.totalorder %s20, 1
        %s774 = scalar_select %p773, %s20, 1
        %s775 = smul.addr %s774, 2
        %s776 = smul.addr %s775, 2
        %s777 = scalar_lea.vmem %s4, %s776
        // Predicated region
        $region41: #{projector_forward.3} parent=31 // pred_check
          %p778 = pneg %p106
        $region42: #{projector_forward.3} parent=31 // pred_check_branch
          %780 = sbr.rel (%p778) target = $region44
        $region43: #{projector_forward.3} parent=31 // pred_region
          %s781 = smul.u32 16, %s20
        $region44: #{projector_forward.3} parent=31 // pred_fallthru
          _
        // Predicated region
        $region45: #{projector_forward.3} parent=31 // pred_check
          %p782 = pneg %p132
        $region46: #{projector_forward.3} parent=31 // pred_check_branch
          %784 = sbr.rel (%p782) target = $region48
        $region47: #{projector_forward.3} parent=31 // pred_region
          _
        $region48: #{projector_forward.3} parent=31 // pred_fallthru
          _
      $region32: #{projector_forward.3} parent=5 // pred_fallthru
        _
      %p785 = scmp.le.s32.totalorder 2, %s15
      // Predicated region
      $region49: #{projector_forward.3} parent=5 // pred_check
        %p786 = pneg %p785
      $region50: #{projector_forward.3} parent=5 // pred_check_branch
        %788 = sbr.rel (%p786) target = $region52
      $region51: #{projector_forward.3} parent=5 // pred_region
        %s789 = ssub.s32 %s15, 2
        // Predicated region
        $region53: #{projector_forward.3} parent=51 // pred_check
          %p790 = pneg %p112
        $region54: #{projector_forward.3} parent=51 // pred_check_branch
          %792 = sbr.rel (%p790) target = $region56
        $region55: #{projector_forward.3} parent=51 // pred_region
          %s793 = smul.u32 16, %s21
          %p794 = scmp.lt.s32.totalorder %s793, 31
          %s795 = scalar_select %p794, %s793, 31
          %s796 = smul.addr %s795, 2
          %s797 = smul.addr %s796, 4
          %s798 = scalar_lea.vmem %s3, %s797
        $region56: #{projector_forward.3} parent=51 // pred_fallthru
          _
        // Predicated region
        $region57: #{projector_forward.3} parent=51 // pred_check
          %p799 = pneg %p138
        $region58: #{projector_forward.3} parent=51 // pred_check_branch
          %801 = sbr.rel (%p799) target = $region60
        $region59: #{projector_forward.3} parent=51 // pred_region
          %p802 = scmp.lt.s32.totalorder %s21, 1
          %s803 = scalar_select %p802, %s21, 1
          %s804 = smul.addr %s803, 2
          %s805 = smul.addr %s804, 2
          %s806 = scalar_lea.vmem %s4, %s805
        $region60: #{projector_forward.3} parent=51 // pred_fallthru
          _
      $region52: #{projector_forward.3} parent=5 // pred_fallthru
        _
    $region6: #{projector_forward.3} parent=1 // loop_footer
      %s19 = sadd.s32 1, %s15
    $region7: #{projector_forward.3} parent=1 // loop_footer_branch
      %14 = sbr.rel target = $region3
    $region8: #{projector_forward.3} parent=1 // loop_exit
      _
    %807 = vsyncpa [#allocation3], 1
    %s808 = scalar_lea.sflag [#allocation3], 1
    %809 = vsyncpa %s808, 1
    %810 = vsyncpa [#allocation5], 1

// kernel: projector_forward.4
$region0: #{projector_forward.4}
  #allocation0 [shape = 'u32[]', space=smem, size = 0x4, offset = 0x4, fixed_abs, tag = 'smem constant byte address 0x4 - core index']
  #allocation1 [shape = 'u32[144,128]{1,0:T(1,128)}', space=vmem, size = 0x12000, scoped, tag = 'internal scratch']
  %s0 = inlined_call_operand.vmem [shape: bf16[256,256], index: 0, kind: input, shape index: {}]
  %s1 = inlined_call_operand.vmem [shape: f32[1,256], index: 1, kind: input, shape index: {}]
  %s2 = inlined_call_operand.vmem [shape: f32[1,256], index: 2, kind: input, shape index: {}]
  %s3 = inlined_call_operand.hbm [shape: bf16[256,512], index: 3, kind: input, shape index: {}]
  %s4 = inlined_call_operand.vmem [shape: f32[1,512], index: 4, kind: input, shape index: {}]
  %s5 = inlined_call_operand.vmem [shape: bf16[256,512], index: 5, kind: output, shape index: {0}]
  %s6 = inlined_call_operand.vmem [shape: f32[2,2,512], index: 6, kind: output, shape index: {1}]
  %7 = xla_tuple %s5, %s6
  %s8 = sld [smem:[#allocation0]]
  $region65: #{projector_forward.4} parent=0
    _
  %s10 = ssub.s32 1, %s8
  %s11 = scalar_select 0, %s10, %s8
  $region1: #{projector_forward.4} parent=0
    #allocation2 [shape = 'u8[262144]{0}', space=vmem, size = 0x40000, scoped, tag = 'input window, operand 3, single buffered']
    #allocation3 [shape = 's32[2]{0}', space=sflag, size = 0x8, scoped, tag = 'scoped memory for projector_forward.4']
    %12 = vsyncpa [#allocation3], 0
    loop: start=0, step=1, limit=4
    $region2: #{projector_forward.4} parent=1 // loop_pre_header
      _
    $region3: #{projector_forward.4} parent=1 // loop_header
      %s14 = sphi 0, %s18
      %p15 = scmp.ge.s32.totalorder %s14, 4
      %s24 = sphi 0, %s26
      %s27 = sphi 0, %s24
      %s28 = sphi 0, %s27
      %s44 = sphi 0, %s28
      %s48 = sphi 0, %s48
      %s50 = sphi 0, %s48
      %s51 = sphi 0, %s50
      %s65 = sphi 0, %s51
      %s69 = sphi 0, %s69
      %s71 = sphi 0, %s69
      %s72 = sphi 0, %s71
      %s86 = sphi 0, %s72
      %s90 = sphi 0, %s90
      %s92 = sphi 0, %s90
      %s93 = sphi 0, %s92
      %s107 = sphi 0, %s93
      %s111 = sphi 0, %s111
      %s113 = sphi 0, %s111
      %s114 = sphi 0, %s113
      %s128 = sphi 0, %s114
      %s134 = sphi 0, %s136
      %s137 = sphi 0, %s134
      %s138 = sphi 0, %s137
      %s154 = sphi 0, %s138
      %s160 = sphi 0, %s162
      %s163 = sphi 0, %s160
      %s164 = sphi 0, %s163
      %s180 = sphi 0, %s164
    $region4: #{projector_forward.4} parent=1 // loop_header_branch
      %17 = sbr.rel (%p15) target = $region8
    $region5: #{projector_forward.4} parent=1 // loop_body
      %s19 = ssub.s32 %s14, 1
      %s20 = ssub.s32 %s14, 2
      %s21 = sadd.s32 %s14, 1
      %s22 = ssub.s32 %s14, %s21
      %p23 = scmp.eq.s32.totalorder %s22, 0
      %s25 = sadd.s32 %s24, 1
      %s26 = scalar_select %p23, %s24, %s25
      %p29 = pneg %p23
      %p30 = scmp.eq.s32.totalorder %s14, 1
      %p31 = por %p29, %p30
      %p32 = scmp.ne.s32.totalorder %s24, %s27
      %p33 = scmp.eq.s32.totalorder %s14, 0
      %p34 = por %p32, %p33
      %p35 = scmp.ne.s32.totalorder %s24, %s27
      %p36 = scmp.eq.s32.totalorder %s19, 1
      %p37 = por %p35, %p36
      %p38 = scmp.ne.s32.totalorder %s27, %s28
      %p39 = scmp.eq.s32.totalorder %s19, 0
      %p40 = por %p38, %p39
      %p41 = scmp.ne.s32.totalorder %s27, %s28
      %p42 = scmp.eq.s32.totalorder %s20, 1
      %p43 = por %p41, %p42
      %p45 = scmp.ne.s32.totalorder %s28, %s44
      %p46 = scmp.eq.s32.totalorder %s20, 0
      %p47 = por %p45, %p46
      %s49 = sadd.s32 %s48, 1
      %p52 = scmp.eq.s32.totalorder %s14, 1
      %p53 = scmp.ne.s32.totalorder %s48, %s50
      %p54 = scmp.eq.s32.totalorder %s14, 0
      %p55 = por %p53, %p54
      %p56 = scmp.ne.s32.totalorder %s48, %s50
      %p57 = scmp.eq.s32.totalorder %s19, 1
      %p58 = por %p56, %p57
      %p59 = scmp.ne.s32.totalorder %s50, %s51
      %p60 = scmp.eq.s32.totalorder %s19, 0
      %p61 = por %p59, %p60
      %p62 = scmp.ne.s32.totalorder %s50, %s51
      %p63 = scmp.eq.s32.totalorder %s20, 1
      %p64 = por %p62, %p63
      %p66 = scmp.ne.s32.totalorder %s51, %s65
      %p67 = scmp.eq.s32.totalorder %s20, 0
      %p68 = por %p66, %p67
      %s70 = sadd.s32 %s69, 1
      %p73 = scmp.eq.s32.totalorder %s14, 1
      %p74 = scmp.ne.s32.totalorder %s69, %s71
      %p75 = scmp.eq.s32.totalorder %s14, 0
      %p76 = por %p74, %p75
      %p77 = scmp.ne.s32.totalorder %s69, %s71
      %p78 = scmp.eq.s32.totalorder %s19, 1
      %p79 = por %p77, %p78
      %p80 = scmp.ne.s32.totalorder %s71, %s72
      %p81 = scmp.eq.s32.totalorder %s19, 0
      %p82 = por %p80, %p81
      %p83 = scmp.ne.s32.totalorder %s71, %s72
      %p84 = scmp.eq.s32.totalorder %s20, 1
      %p85 = por %p83, %p84
      %p87 = scmp.ne.s32.totalorder %s72, %s86
      %p88 = scmp.eq.s32.totalorder %s20, 0
      %p89 = por %p87, %p88
      %s91 = sadd.s32 %s90, 1
      %p94 = scmp.eq.s32.totalorder %s14, 1
      %p95 = scmp.ne.s32.totalorder %s90, %s92
      %p96 = scmp.eq.s32.totalorder %s14, 0
      %p97 = por %p95, %p96
      %p98 = scmp.ne.s32.totalorder %s90, %s92
      %p99 = scmp.eq.s32.totalorder %s19, 1
      %p100 = por %p98, %p99
      %p101 = scmp.ne.s32.totalorder %s92, %s93
      %p102 = scmp.eq.s32.totalorder %s19, 0
      %p103 = por %p101, %p102
      %p104 = scmp.ne.s32.totalorder %s92, %s93
      %p105 = scmp.eq.s32.totalorder %s20, 1
      %p106 = por %p104, %p105
      %p108 = scmp.ne.s32.totalorder %s93, %s107
      %p109 = scmp.eq.s32.totalorder %s20, 0
      %p110 = por %p108, %p109
      %s112 = sadd.s32 %s111, 1
      %p115 = scmp.eq.s32.totalorder %s14, 1
      %p116 = scmp.ne.s32.totalorder %s111, %s113
      %p117 = scmp.eq.s32.totalorder %s14, 0
      %p118 = por %p116, %p117
      %p119 = scmp.ne.s32.totalorder %s111, %s113
      %p120 = scmp.eq.s32.totalorder %s19, 1
      %p121 = por %p119, %p120
      %p122 = scmp.ne.s32.totalorder %s113, %s114
      %p123 = scmp.eq.s32.totalorder %s19, 0
      %p124 = por %p122, %p123
      %p125 = scmp.ne.s32.totalorder %s113, %s114
      %p126 = scmp.eq.s32.totalorder %s20, 1
      %p127 = por %p125, %p126
      %p129 = scmp.ne.s32.totalorder %s114, %s128
      %p130 = scmp.eq.s32.totalorder %s20, 0
      %p131 = por %p129, %p130
      %s132 = ssub.s32 %s14, %s21
      %p133 = scmp.eq.s32.totalorder %s132, 0
      %s135 = sadd.s32 %s134, 1
      %s136 = scalar_select %p133, %s134, %s135
      %p139 = pneg %p133
      %p140 = scmp.eq.s32.totalorder %s14, 1
      %p141 = por %p139, %p140
      %p142 = scmp.ne.s32.totalorder %s134, %s137
      %p143 = scmp.eq.s32.totalorder %s14, 0
      %p144 = por %p142, %p143
      %p145 = scmp.ne.s32.totalorder %s134, %s137
      %p146 = scmp.eq.s32.totalorder %s19, 1
      %p147 = por %p145, %p146
      %p148 = scmp.ne.s32.totalorder %s137, %s138
      %p149 = scmp.eq.s32.totalorder %s19, 0
      %p150 = por %p148, %p149
      %p151 = scmp.ne.s32.totalorder %s137, %s138
      %p152 = scmp.eq.s32.totalorder %s20, 1
      %p153 = por %p151, %p152
      %p155 = scmp.ne.s32.totalorder %s138, %s154
      %p156 = scmp.eq.s32.totalorder %s20, 0
      %p157 = por %p155, %p156
      %s158 = ssub.s32 %s14, %s21
      %p159 = scmp.eq.s32.totalorder %s158, 0
      %s161 = sadd.s32 %s160, 1
      %s162 = scalar_select %p159, %s160, %s161
      %p165 = pneg %p159
      %p166 = scmp.eq.s32.totalorder %s14, 1
      %p167 = por %p165, %p166
      %p168 = scmp.ne.s32.totalorder %s160, %s163
      %p169 = scmp.eq.s32.totalorder %s14, 0
      %p170 = por %p168, %p169
      %p171 = scmp.ne.s32.totalorder %s160, %s163
      %p172 = scmp.eq.s32.totalorder %s19, 1
      %p173 = por %p171, %p172
      %p174 = scmp.ne.s32.totalorder %s163, %s164
      %p175 = scmp.eq.s32.totalorder %s19, 0
      %p176 = por %p174, %p175
      %p177 = scmp.ne.s32.totalorder %s163, %s164
      %p178 = scmp.eq.s32.totalorder %s20, 1
      %p179 = por %p177, %p178
      %p181 = scmp.ne.s32.totalorder %s164, %s180
      %p182 = scmp.eq.s32.totalorder %s20, 0
      %p183 = por %p181, %p182
      %p184 = scmp.le.s32.totalorder 1, %s14
      %p185 = scmp.lt.s32.totalorder %s14, 3
      %p186 = pnand %p184, %p185
      %p187 = pneg %p186
      // Predicated region
      $region9: #{projector_forward.4} parent=5 // pred_check
        _
      $region10: #{projector_forward.4} parent=5 // pred_check_branch
        %189 = sbr.rel (%p186) target = $region12
      $region11: #{projector_forward.4} parent=5 // pred_region
        %s190 = ssub.s32 %s14, 1
        // Predicated region
        $region13: #{projector_forward.4} parent=11 // pred_check
          %p191 = pneg %p61
        $region14: #{projector_forward.4} parent=11 // pred_check_branch
          %193 = sbr.rel (%p191) target = $region16
        $region15: #{projector_forward.4} parent=11 // pred_region
          _
        $region16: #{projector_forward.4} parent=11 // pred_fallthru
          _
        // Predicated region
        $region17: #{projector_forward.4} parent=11 // pred_check
          %p194 = pneg %p82
        $region18: #{projector_forward.4} parent=11 // pred_check_branch
          %196 = sbr.rel (%p194) target = $region20
        $region19: #{projector_forward.4} parent=11 // pred_region
          _
        $region20: #{projector_forward.4} parent=11 // pred_fallthru
          _
        // Predicated region
        $region21: #{projector_forward.4} parent=11 // pred_check
          %p197 = pneg %p103
        $region22: #{projector_forward.4} parent=11 // pred_check_branch
          %199 = sbr.rel (%p197) target = $region24
        $region23: #{projector_forward.4} parent=11 // pred_region
          %s201 = ssub.s32 8192, 8192
          %202 = vsyncadd [#allocation3], %s201
          %s203 = sshll.u32 [#allocation2], 4
          %s204 = int_to_ptr.vmem [resolvable:$true] %s203
          %209 = dma.hbm_to_vmem [thread:$0]  %s3, 8192, %s204, [#allocation3], 256, 256, 16
        $region24: #{projector_forward.4} parent=11 // pred_fallthru
          _
        // Predicated region
        $region25: #{projector_forward.4} parent=11 // pred_check
          %p210 = pneg %p124
        $region26: #{projector_forward.4} parent=11 // pred_check_branch
          %212 = sbr.rel (%p210) target = $region28
        $region27: #{projector_forward.4} parent=11 // pred_region
          _
        $region28: #{projector_forward.4} parent=11 // pred_fallthru
          _
      $region12: #{projector_forward.4} parent=5 // pred_fallthru
        _
      %p213 = scmp.lt.s32.totalorder %s14, 2
      // Predicated region
      $region29: #{projector_forward.4} parent=5 // pred_check
        %p214 = pneg %p213
      $region30: #{projector_forward.4} parent=5 // pred_check_branch
        %216 = sbr.rel (%p214) target = $region32
      $region31: #{projector_forward.4} parent=5 // pred_region
        // Predicated region
        $region33: #{projector_forward.4} parent=31 // pred_check
          %p217 = pneg %p34
        $region34: #{projector_forward.4} parent=31 // pred_check_branch
          %219 = sbr.rel (%p217) target = $region36
        $region35: #{projector_forward.4} parent=31 // pred_region
          %s220 = smul.u32 16, %s14
          %p221 = scmp.lt.s32.totalorder %s220, 31
          %s222 = scalar_select %p221, %s220, 31
          %s223 = smul.addr %s222, 2
          %s224 = smul.addr %s223, 4
          %s225 = scalar_lea.vmem %s0, %s224
          %s226 = smul.u32 16, %s14
        $region36: #{projector_forward.4} parent=31 // pred_fallthru
          _
      $region32: #{projector_forward.4} parent=5 // pred_fallthru
        _
      %p227 = scmp.le.s32.totalorder 1, %s14
      %p228 = scmp.lt.s32.totalorder %s14, 3
      %p229 = pnand %p227, %p228
      %p230 = pneg %p229
      // Predicated region
      $region37: #{projector_forward.4} parent=5 // pred_check
        _
      $region38: #{projector_forward.4} parent=5 // pred_check_branch
        %232 = sbr.rel (%p229) target = $region40
      $region39: #{projector_forward.4} parent=5 // pred_region
        %s233 = ssub.s32 %s14, 1
        // Predicated region
        $region41: #{projector_forward.4} parent=39 // pred_check
          %p234 = pneg %p103
        $region42: #{projector_forward.4} parent=39 // pred_check_branch
          %236 = sbr.rel (%p234) target = $region44
        $region43: #{projector_forward.4} parent=39 // pred_region
          %237 = dma.done [#allocation3], 8192
        $region44: #{projector_forward.4} parent=39 // pred_fallthru
          _
        %s238 = smul.u32 16, %s19
        %p239 = scmp.lt.s32.totalorder %s238, 31
        %s240 = scalar_select %p239, %s238, 31
        %s241 = smul.addr %s240, 2
        %s242 = smul.addr %s241, 4
        %s243 = scalar_lea.vmem %s0, %s242
        %p244 = pneg %p40
        %p245 = pneg %p37
        %p246 = pneg %p61
        %p247 = pneg %p58
        %p248 = pneg %p82
        %p249 = pneg %p79
        %p250 = pneg %p103
        %p251 = pneg %p100
        %p252 = pneg %p124
        %p253 = pneg %p121
        %p254 = pneg %p150
        %p255 = pneg %p147
        %s256 = smul.u32 16, %s19
        %p257 = scmp.lt.s32.totalorder %s256, 31
        %s258 = scalar_select %p257, %s256, 31
        %s259 = smul.addr %s258, 4
        %s260 = smul.addr %s259, 4
        %s261 = scalar_lea.vmem %s5, %s260
        %p262 = pneg %p176
        %p263 = pneg %p173
        %p264 = scmp.lt.s32.totalorder %s19, 1
        %s265 = scalar_select %p264, %s19, 1
        %s266 = smul.addr %s265, 4
        %s267 = smul.addr %s266, 2
        %s268 = scalar_lea.vmem %s6, %s267
        %s269 = smul.u32 16, %s19
        %p270 = scmp.lt.s32.totalorder %s269, 31
        %s271 = scalar_select %p270, %s269, 31
        %s272 = smul.addr %s271, 2
        %s273 = smul.addr %s272, 4
        %s274 = scalar_lea.vmem %s0, %s273
        %s275 = smul.u32 16, %s19
        %s276 = smul.u32 16, %s19
        %p277 = scmp.lt.s32.totalorder %s276, 31
        %s278 = scalar_select %p277, %s276, 31
        %s279 = smul.addr %s278, 4
        %s280 = smul.addr %s279, 4
        %s281 = scalar_lea.vmem %s5, %s280
        %s282 = smul.u32 16, %s19
        %p283 = scmp.lt.s32.totalorder %s19, 1
        %s284 = scalar_select %p283, %s19, 1
        %s285 = smul.addr %s284, 4
        %s286 = smul.addr %s285, 2
        %s287 = scalar_lea.vmem %s6, %s286
        %v288 = vld [vmem:[%s274] sm:$0xff]
        %v289 = vld [vmem:[%s274 + $0x8] sm:$0xff]
        %v290 = vld [vmem:[%s274 + $0x10] sm:$0xff]
        %v291 = vld [vmem:[%s274 + $0x18] sm:$0xff]
        %v292 = vld [vmem:[%s274 + $0x20] sm:$0xff]
        %v293 = vld [vmem:[%s274 + $0x28] sm:$0xff]
        %v294 = vld [vmem:[%s274 + $0x30] sm:$0xff]
        %v295 = vld [vmem:[%s274 + $0x38] sm:$0xff]
        %v296 = vld [vmem:[%s274 + $0x40] sm:$0xff]
        %v297 = vld [vmem:[%s274 + $0x48] sm:$0xff]
        %v298 = vld [vmem:[%s274 + $0x50] sm:$0xff]
        %v299 = vld [vmem:[%s274 + $0x58] sm:$0xff]
        %v300 = vld [vmem:[%s274 + $0x60] sm:$0xff]
        %v301 = vld [vmem:[%s274 + $0x68] sm:$0xff]
        %v302 = vld [vmem:[%s274 + $0x70] sm:$0xff]
        %v303 = vld [vmem:[%s274 + $0x78] sm:$0xff]
        %v304 = vunpack.c.l.bf16 %v288
        %v305 = vunpack.c.h.bf16 %v288
        %v306 = vunpack.c.l.bf16 %v289
        %v307 = vunpack.c.h.bf16 %v289
        %v308 = vunpack.c.l.bf16 %v290
        %v309 = vunpack.c.h.bf16 %v290
        %v310 = vunpack.c.l.bf16 %v291
        %v311 = vunpack.c.h.bf16 %v291
        %v312 = vunpack.c.l.bf16 %v292
        %v313 = vunpack.c.h.bf16 %v292
        %v314 = vunpack.c.l.bf16 %v293
        %v315 = vunpack.c.h.bf16 %v293
        %v316 = vunpack.c.l.bf16 %v294
        %v317 = vunpack.c.h.bf16 %v294
        %v318 = vunpack.c.l.bf16 %v295
        %v319 = vunpack.c.h.bf16 %v295
        %v320 = vunpack.c.l.bf16 %v296
        %v321 = vunpack.c.h.bf16 %v296
        %v322 = vunpack.c.l.bf16 %v297
        %v323 = vunpack.c.h.bf16 %v297
        %v324 = vunpack.c.l.bf16 %v298
        %v325 = vunpack.c.h.bf16 %v298
        %v326 = vunpack.c.l.bf16 %v299
        %v327 = vunpack.c.h.bf16 %v299
        %v328 = vunpack.c.l.bf16 %v300
        %v329 = vunpack.c.h.bf16 %v300
        %v330 = vunpack.c.l.bf16 %v301
        %v331 = vunpack.c.h.bf16 %v301
        %v332 = vunpack.c.l.bf16 %v302
        %v333 = vunpack.c.h.bf16 %v302
        %v334 = vunpack.c.l.bf16 %v303
        %v335 = vunpack.c.h.bf16 %v303
        %v336 = vld [vmem:[%s1] sm:$0x3]
        %v338 = vlaneseq
        %v339 = vshrl.u32 %v338, 7
        %v340 = vsub.s32 0, %v339
        %v341 = vrot.slane %v336, %v340
        %v342 = vlaneseq
        %v343 = vshrl.u32 %v342, 7
        %v344 = vsub.s32 1, %v343
        %v345 = vrot.slane %v336, %v344
        %v348 = vmul.f32 %v304, %v341
        %v349 = vmul.f32 %v305, %v345
        %v350 = vmul.f32 %v306, %v341
        %v351 = vmul.f32 %v307, %v345
        %v352 = vmul.f32 %v308, %v341
        %v353 = vmul.f32 %v309, %v345
        %v354 = vmul.f32 %v310, %v341
        %v355 = vmul.f32 %v311, %v345
        %v356 = vmul.f32 %v312, %v341
        %v357 = vmul.f32 %v313, %v345
        %v358 = vmul.f32 %v314, %v341
        %v359 = vmul.f32 %v315, %v345
        %v360 = vmul.f32 %v316, %v341
        %v361 = vmul.f32 %v317, %v345
        %v362 = vmul.f32 %v318, %v341
        %v363 = vmul.f32 %v319, %v345
        %v364 = vmul.f32 %v320, %v341
        %v365 = vmul.f32 %v321, %v345
        %v366 = vmul.f32 %v322, %v341
        %v367 = vmul.f32 %v323, %v345
        %v368 = vmul.f32 %v324, %v341
        %v369 = vmul.f32 %v325, %v345
        %v370 = vmul.f32 %v326, %v341
        %v371 = vmul.f32 %v327, %v345
        %v372 = vmul.f32 %v328, %v341
        %v373 = vmul.f32 %v329, %v345
        %v374 = vmul.f32 %v330, %v341
        %v375 = vmul.f32 %v331, %v345
        %v376 = vmul.f32 %v332, %v341
        %v377 = vmul.f32 %v333, %v345
        %v378 = vmul.f32 %v334, %v341
        %v379 = vmul.f32 %v335, %v345
        %v380 = vld [vmem:[%s2] sm:$0x3]
        %v382 = vlaneseq
        %v383 = vshrl.u32 %v382, 7
        %v384 = vsub.s32 0, %v383
        %v385 = vrot.slane %v380, %v384
        %v386 = vlaneseq
        %v387 = vshrl.u32 %v386, 7
        %v388 = vsub.s32 1, %v387
        %v389 = vrot.slane %v380, %v388
        %v392 = vadd.f32 %v348, %v385
        %v393 = vadd.f32 %v349, %v389
        %v394 = vadd.f32 %v350, %v385
        %v395 = vadd.f32 %v351, %v389
        %v396 = vadd.f32 %v352, %v385
        %v397 = vadd.f32 %v353, %v389
        %v398 = vadd.f32 %v354, %v385
        %v399 = vadd.f32 %v355, %v389
        %v400 = vadd.f32 %v356, %v385
        %v401 = vadd.f32 %v357, %v389
        %v402 = vadd.f32 %v358, %v385
        %v403 = vadd.f32 %v359, %v389
        %v404 = vadd.f32 %v360, %v385
        %v405 = vadd.f32 %v361, %v389
        %v406 = vadd.f32 %v362, %v385
        %v407 = vadd.f32 %v363, %v389
        %v408 = vadd.f32 %v364, %v385
        %v409 = vadd.f32 %v365, %v389
        %v410 = vadd.f32 %v366, %v385
        %v411 = vadd.f32 %v367, %v389
        %v412 = vadd.f32 %v368, %v385
        %v413 = vadd.f32 %v369, %v389
        %v414 = vadd.f32 %v370, %v385
        %v415 = vadd.f32 %v371, %v389
        %v416 = vadd.f32 %v372, %v385
        %v417 = vadd.f32 %v373, %v389
        %v418 = vadd.f32 %v374, %v385
        %v419 = vadd.f32 %v375, %v389
        %v420 = vadd.f32 %v376, %v385
        %v421 = vadd.f32 %v377, %v389
        %v422 = vadd.f32 %v378, %v385
        %v423 = vadd.f32 %v379, %v389
        %v424 = vmax.f32 %v392, 0.0
        %v425 = vmax.f32 %v393, 0.0
        %v426 = vmax.f32 %v394, 0.0
        %v427 = vmax.f32 %v395, 0.0
        %v428 = vmax.f32 %v396, 0.0
        %v429 = vmax.f32 %v397, 0.0
        %v430 = vmax.f32 %v398, 0.0
        %v431 = vmax.f32 %v399, 0.0
        %v432 = vmax.f32 %v400, 0.0
        %v433 = vmax.f32 %v401, 0.0
        %v434 = vmax.f32 %v402, 0.0
        %v435 = vmax.f32 %v403, 0.0
        %v436 = vmax.f32 %v404, 0.0
        %v437 = vmax.f32 %v405, 0.0
        %v438 = vmax.f32 %v406, 0.0
        %v439 = vmax.f32 %v407, 0.0
        %v440 = vmax.f32 %v408, 0.0
        %v441 = vmax.f32 %v409, 0.0
        %v442 = vmax.f32 %v410, 0.0
        %v443 = vmax.f32 %v411, 0.0
        %v444 = vmax.f32 %v412, 0.0
        %v445 = vmax.f32 %v413, 0.0
        %v446 = vmax.f32 %v414, 0.0
        %v447 = vmax.f32 %v415, 0.0
        %v448 = vmax.f32 %v416, 0.0
        %v449 = vmax.f32 %v417, 0.0
        %v450 = vmax.f32 %v418, 0.0
        %v451 = vmax.f32 %v419, 0.0
        %v452 = vmax.f32 %v420, 0.0
        %v453 = vmax.f32 %v421, 0.0
        %v454 = vmax.f32 %v422, 0.0
        %v455 = vmax.f32 %v423, 0.0
        %v456 = vpack.c.bf16 %v426, %v424
        %v457 = vpack.c.bf16 %v427, %v425
        %v458 = vpack.c.bf16 %v430, %v428
        %v459 = vpack.c.bf16 %v431, %v429
        %v460 = vpack.c.bf16 %v434, %v432
        %v461 = vpack.c.bf16 %v435, %v433
        %v462 = vpack.c.bf16 %v438, %v436
        %v463 = vpack.c.bf16 %v439, %v437
        %v464 = vpack.c.bf16 %v442, %v440
        %v465 = vpack.c.bf16 %v443, %v441
        %v466 = vpack.c.bf16 %v446, %v444
        %v467 = vpack.c.bf16 %v447, %v445
        %v468 = vpack.c.bf16 %v450, %v448
        %v469 = vpack.c.bf16 %v451, %v449
        %v470 = vpack.c.bf16 %v454, %v452
        %v471 = vpack.c.bf16 %v455, %v453
        %v472 = vld [vmem:[#allocation2] sm:$0xff]
        %v473 = vld [vmem:[#allocation2 + $0x8] sm:$0xff]
        %v474 = vld [vmem:[#allocation2 + $0x10] sm:$0xff]
        %v475 = vld [vmem:[#allocation2 + $0x18] sm:$0xff]
        %v476 = vld [vmem:[#allocation2 + $0x20] sm:$0xff]
        %v477 = vld [vmem:[#allocation2 + $0x28] sm:$0xff]
        %v478 = vld [vmem:[#allocation2 + $0x30] sm:$0xff]
        %v479 = vld [vmem:[#allocation2 + $0x38] sm:$0xff]
        %v480 = vld [vmem:[#allocation2 + $0x40] sm:$0xff]
        %v481 = vld [vmem:[#allocation2 + $0x48] sm:$0xff]
        %v482 = vld [vmem:[#allocation2 + $0x50] sm:$0xff]
        %v483 = vld [vmem:[#allocation2 + $0x58] sm:$0xff]
        %v484 = vld [vmem:[#allocation2 + $0x60] sm:$0xff]
        %v485 = vld [vmem:[#allocation2 + $0x68] sm:$0xff]
        %v486 = vld [vmem:[#allocation2 + $0x70] sm:$0xff]
        %v487 = vld [vmem:[#allocation2 + $0x78] sm:$0xff]
        %v488 = vld [vmem:[#allocation2 + $0x80] sm:$0xff]
        %v489 = vld [vmem:[#allocation2 + $0x88] sm:$0xff]
        %v490 = vld [vmem:[#allocation2 + $0x90] sm:$0xff]
        %v491 = vld [vmem:[#allocation2 + $0x98] sm:$0xff]
        %v492 = vld [vmem:[#allocation2 + $0xa0] sm:$0xff]
        %v493 = vld [vmem:[#allocation2 + $0xa8] sm:$0xff]
        %v494 = vld [vmem:[#allocation2 + $0xb0] sm:$0xff]
        %v495 = vld [vmem:[#allocation2 + $0xb8] sm:$0xff]
        %v496 = vld [vmem:[#allocation2 + $0xc0] sm:$0xff]
        %v497 = vld [vmem:[#allocation2 + $0xc8] sm:$0xff]
        %v498 = vld [vmem:[#allocation2 + $0xd0] sm:$0xff]
        %v499 = vld [vmem:[#allocation2 + $0xd8] sm:$0xff]
        %v500 = vld [vmem:[#allocation2 + $0xe0] sm:$0xff]
        %v501 = vld [vmem:[#allocation2 + $0xe8] sm:$0xff]
        %v502 = vld [vmem:[#allocation2 + $0xf0] sm:$0xff]
        %v503 = vld [vmem:[#allocation2 + $0xf8] sm:$0xff]
        %v504 = vld [vmem:[#allocation2 + $0x100] sm:$0xff]
        %v505 = vld [vmem:[#allocation2 + $0x108] sm:$0xff]
        %v506 = vld [vmem:[#allocation2 + $0x110] sm:$0xff]
        %v507 = vld [vmem:[#allocation2 + $0x118] sm:$0xff]
        %v508 = vld [vmem:[#allocation2 + $0x120] sm:$0xff]
        %v509 = vld [vmem:[#allocation2 + $0x128] sm:$0xff]
        %v510 = vld [vmem:[#allocation2 + $0x130] sm:$0xff]
        %v511 = vld [vmem:[#allocation2 + $0x138] sm:$0xff]
        %v512 = vld [vmem:[#allocation2 + $0x140] sm:$0xff]
        %v513 = vld [vmem:[#allocation2 + $0x148] sm:$0xff]
        %v514 = vld [vmem:[#allocation2 + $0x150] sm:$0xff]
        %v515 = vld [vmem:[#allocation2 + $0x158] sm:$0xff]
        %v516 = vld [vmem:[#allocation2 + $0x160] sm:$0xff]
        %v517 = vld [vmem:[#allocation2 + $0x168] sm:$0xff]
        %v518 = vld [vmem:[#allocation2 + $0x170] sm:$0xff]
        %v519 = vld [vmem:[#allocation2 + $0x178] sm:$0xff]
        %v520 = vld [vmem:[#allocation2 + $0x180] sm:$0xff]
        %v521 = vld [vmem:[#allocation2 + $0x188] sm:$0xff]
        %v522 = vld [vmem:[#allocation2 + $0x190] sm:$0xff]
        %v523 = vld [vmem:[#allocation2 + $0x198] sm:$0xff]
        %v524 = vld [vmem:[#allocation2 + $0x1a0] sm:$0xff]
        %v525 = vld [vmem:[#allocation2 + $0x1a8] sm:$0xff]
        %v526 = vld [vmem:[#allocation2 + $0x1b0] sm:$0xff]
        %v527 = vld [vmem:[#allocation2 + $0x1b8] sm:$0xff]
        %v528 = vld [vmem:[#allocation2 + $0x1c0] sm:$0xff]
        %v529 = vld [vmem:[#allocation2 + $0x1c8] sm:$0xff]
        %v530 = vld [vmem:[#allocation2 + $0x1d0] sm:$0xff]
        %v531 = vld [vmem:[#allocation2 + $0x1d8] sm:$0xff]
        %v532 = vld [vmem:[#allocation2 + $0x1e0] sm:$0xff]
        %v533 = vld [vmem:[#allocation2 + $0x1e8] sm:$0xff]
        %v534 = vld [vmem:[#allocation2 + $0x1f0] sm:$0xff]
        %v535 = vld [vmem:[#allocation2 + $0x1f8] sm:$0xff]
        %v536 = vld [vmem:[%s4] sm:$0xf]
        %v538 = vlaneseq
        %v539 = vshrl.u32 %v538, 7
        %v540 = vsub.s32 0, %v539
        %v541 = vrot.slane %v536, %v540
        %v542 = vlaneseq
        %v543 = vshrl.u32 %v542, 7
        %v544 = vsub.s32 1, %v543
        %v545 = vrot.slane %v536, %v544
        %v546 = vlaneseq
        %v547 = vshrl.u32 %v546, 7
        %v548 = vsub.s32 2, %v547
        %v549 = vrot.slane %v536, %v548
        %v550 = vlaneseq
        %v551 = vshrl.u32 %v550, 7
        %v552 = vsub.s32 3, %v551
        %v553 = vrot.slane %v536, %v552
        %v622 = vunpack.c.l.b16 %v472
        %v623 = vunpack.c.h.b16 %v472
        %v624 = vunpack.c.l.b16 %v473
        %v625 = vunpack.c.h.b16 %v473
        %v626 = vunpack.c.l.b16 %v474
        %v627 = vunpack.c.h.b16 %v474
        %v628 = vunpack.c.l.b16 %v475
        %v629 = vunpack.c.h.b16 %v475
        %v630 = vunpack.c.l.b16 %v476
        %v631 = vunpack.c.h.b16 %v476
        %v632 = vunpack.c.l.b16 %v477
        %v633 = vunpack.c.h.b16 %v477
        %v634 = vunpack.c.l.b16 %v478
        %v635 = vunpack.c.h.b16 %v478
        %v636 = vunpack.c.l.b16 %v479
        %v637 = vunpack.c.h.b16 %v479
        %v638 = vunpack.c.l.b16 %v480
        %v639 = vunpack.c.h.b16 %v480
        %v640 = vunpack.c.l.b16 %v481
        %v641 = vunpack.c.h.b16 %v481
        %v642 = vunpack.c.l.b16 %v482
        %v643 = vunpack.c.h.b16 %v482
        %v644 = vunpack.c.l.b16 %v483
        %v645 = vunpack.c.h.b16 %v483
        %v646 = vunpack.c.l.b16 %v484
        %v647 = vunpack.c.h.b16 %v484
        %v648 = vunpack.c.l.b16 %v485
        %v649 = vunpack.c.h.b16 %v485
        %v650 = vunpack.c.l.b16 %v486
        %v651 = vunpack.c.h.b16 %v486
        %v652 = vunpack.c.l.b16 %v487
        %v653 = vunpack.c.h.b16 %v487
        %v654 = vunpack.c.l.b16 %v488
        %v655 = vunpack.c.h.b16 %v488
        %v656 = vunpack.c.l.b16 %v489
        %v657 = vunpack.c.h.b16 %v489
        %v658 = vunpack.c.l.b16 %v490
        %v659 = vunpack.c.h.b16 %v490
        %v660 = vunpack.c.l.b16 %v491
        %v661 = vunpack.c.h.b16 %v491
        %v662 = vunpack.c.l.b16 %v492
        %v663 = vunpack.c.h.b16 %v492
        %v664 = vunpack.c.l.b16 %v493
        %v665 = vunpack.c.h.b16 %v493
        %v666 = vunpack.c.l.b16 %v494
        %v667 = vunpack.c.h.b16 %v494
        %v668 = vunpack.c.l.b16 %v495
        %v669 = vunpack.c.h.b16 %v495
        %v670 = vunpack.c.l.b16 %v496
        %v671 = vunpack.c.h.b16 %v496
        %v672 = vunpack.c.l.b16 %v497
        %v673 = vunpack.c.h.b16 %v497
        %v674 = vunpack.c.l.b16 %v498
        %v675 = vunpack.c.h.b16 %v498
        %v676 = vunpack.c.l.b16 %v499
        %v677 = vunpack.c.h.b16 %v499
        %v678 = vunpack.c.l.b16 %v500
        %v679 = vunpack.c.h.b16 %v500
        %v680 = vunpack.c.l.b16 %v501
        %v681 = vunpack.c.h.b16 %v501
        %v682 = vunpack.c.l.b16 %v502
        %v683 = vunpack.c.h.b16 %v502
        %v684 = vunpack.c.l.b16 %v503
        %v685 = vunpack.c.h.b16 %v503
        %v686 = vunpack.c.l.b16 %v504
        %v687 = vunpack.c.h.b16 %v504
        %v688 = vunpack.c.l.b16 %v505
        %v689 = vunpack.c.h.b16 %v505
        %v690 = vunpack.c.l.b16 %v506
        %v691 = vunpack.c.h.b16 %v506
        %v692 = vunpack.c.l.b16 %v507
        %v693 = vunpack.c.h.b16 %v507
        %v694 = vunpack.c.l.b16 %v508
        %v695 = vunpack.c.h.b16 %v508
        %v696 = vunpack.c.l.b16 %v509
        %v697 = vunpack.c.h.b16 %v509
        %v698 = vunpack.c.l.b16 %v510
        %v699 = vunpack.c.h.b16 %v510
        %v700 = vunpack.c.l.b16 %v511
        %v701 = vunpack.c.h.b16 %v511
        %v702 = vunpack.c.l.b16 %v512
        %v703 = vunpack.c.h.b16 %v512
        %v704 = vunpack.c.l.b16 %v513
        %v705 = vunpack.c.h.b16 %v513
        %v706 = vunpack.c.l.b16 %v514
        %v707 = vunpack.c.h.b16 %v514
        %v708 = vunpack.c.l.b16 %v515
        %v709 = vunpack.c.h.b16 %v515
        %v710 = vunpack.c.l.b16 %v516
        %v711 = vunpack.c.h.b16 %v516
        %v712 = vunpack.c.l.b16 %v517
        %v713 = vunpack.c.h.b16 %v517
        %v714 = vunpack.c.l.b16 %v518
        %v715 = vunpack.c.h.b16 %v518
        %v716 = vunpack.c.l.b16 %v519
        %v717 = vunpack.c.h.b16 %v519
        %v718 = vunpack.c.l.b16 %v520
        %v719 = vunpack.c.h.b16 %v520
        %v720 = vunpack.c.l.b16 %v521
        %v721 = vunpack.c.h.b16 %v521
        %v722 = vunpack.c.l.b16 %v522
        %v723 = vunpack.c.h.b16 %v522
        %v724 = vunpack.c.l.b16 %v523
        %v725 = vunpack.c.h.b16 %v523
        %v726 = vunpack.c.l.b16 %v524
        %v727 = vunpack.c.h.b16 %v524
        %v728 = vunpack.c.l.b16 %v525
        %v729 = vunpack.c.h.b16 %v525
        %v730 = vunpack.c.l.b16 %v526
        %v731 = vunpack.c.h.b16 %v526
        %v732 = vunpack.c.l.b16 %v527
        %v733 = vunpack.c.h.b16 %v527
        %v734 = vunpack.c.l.b16 %v528
        %v735 = vunpack.c.h.b16 %v528
        %v736 = vunpack.c.l.b16 %v529
        %v737 = vunpack.c.h.b16 %v529
        %v738 = vunpack.c.l.b16 %v530
        %v739 = vunpack.c.h.b16 %v530
        %v740 = vunpack.c.l.b16 %v531
        %v741 = vunpack.c.h.b16 %v531
        %v742 = vunpack.c.l.b16 %v532
        %v743 = vunpack.c.h.b16 %v532
        %v744 = vunpack.c.l.b16 %v533
        %v745 = vunpack.c.h.b16 %v533
        %v746 = vunpack.c.l.b16 %v534
        %v747 = vunpack.c.h.b16 %v534
        %v748 = vunpack.c.l.b16 %v535
        %v749 = vunpack.c.h.b16 %v535
        %v750 = vpack.c.b16 %v626, %v622
        %v751 = vpack.c.b16 %v627, %v623
        %v752 = vpack.c.b16 %v628, %v624
        %v753 = vpack.c.b16 %v629, %v625
        %v754 = vpack.c.b16 %v634, %v630
        %v755 = vpack.c.b16 %v635, %v631
        %v756 = vpack.c.b16 %v636, %v632
        %v757 = vpack.c.b16 %v637, %v633
        %v758 = vpack.c.b16 %v642, %v638
        %v759 = vpack.c.b16 %v643, %v639
        %v760 = vpack.c.b16 %v644, %v640
        %v761 = vpack.c.b16 %v645, %v641
        %v762 = vpack.c.b16 %v650, %v646
        %v763 = vpack.c.b16 %v651, %v647
        %v764 = vpack.c.b16 %v652, %v648
        %v765 = vpack.c.b16 %v653, %v649
        %v766 = vpack.c.b16 %v658, %v654
        %v767 = vpack.c.b16 %v659, %v655
        %v768 = vpack.c.b16 %v660, %v656
        %v769 = vpack.c.b16 %v661, %v657
        %v770 = vpack.c.b16 %v666, %v662
        %v771 = vpack.c.b16 %v667, %v663
        %v772 = vpack.c.b16 %v668, %v664
        %v773 = vpack.c.b16 %v669, %v665
        %v774 = vpack.c.b16 %v674, %v670
        %v775 = vpack.c.b16 %v675, %v671
        %v776 = vpack.c.b16 %v676, %v672
        %v777 = vpack.c.b16 %v677, %v673
        %v778 = vpack.c.b16 %v682, %v678
        %v779 = vpack.c.b16 %v683, %v679
        %v780 = vpack.c.b16 %v684, %v680
        %v781 = vpack.c.b16 %v685, %v681
        %v782 = vpack.c.b16 %v690, %v686
        %v783 = vpack.c.b16 %v691, %v687
        %v784 = vpack.c.b16 %v692, %v688
        %v785 = vpack.c.b16 %v693, %v689
        %v786 = vpack.c.b16 %v698, %v694
        %v787 = vpack.c.b16 %v699, %v695
        %v788 = vpack.c.b16 %v700, %v696
        %v789 = vpack.c.b16 %v701, %v697
        %v790 = vpack.c.b16 %v706, %v702
        %v791 = vpack.c.b16 %v707, %v703
        %v792 = vpack.c.b16 %v708, %v704
        %v793 = vpack.c.b16 %v709, %v705
        %v794 = vpack.c.b16 %v714, %v710
        %v795 = vpack.c.b16 %v715, %v711
        %v796 = vpack.c.b16 %v716, %v712
        %v797 = vpack.c.b16 %v717, %v713
        %v798 = vpack.c.b16 %v722, %v718
        %v799 = vpack.c.b16 %v723, %v719
        %v800 = vpack.c.b16 %v724, %v720
        %v801 = vpack.c.b16 %v725, %v721
        %v802 = vpack.c.b16 %v730, %v726
        %v803 = vpack.c.b16 %v731, %v727
        %v804 = vpack.c.b16 %v732, %v728
        %v805 = vpack.c.b16 %v733, %v729
        %v806 = vpack.c.b16 %v738, %v734
        %v807 = vpack.c.b16 %v739, %v735
        %v808 = vpack.c.b16 %v740, %v736
        %v809 = vpack.c.b16 %v741, %v737
        %v810 = vpack.c.b16 %v746, %v742
        %v811 = vpack.c.b16 %v747, %v743
        %v812 = vpack.c.b16 %v748, %v744
        %v813 = vpack.c.b16 %v749, %v745
        %878 = vmatprep.subr.bf16.mxu0 %v751
        %879 = vmatpush1.bf16.msra.mxu0 %v750
        %880 = vmatprep.subr.bf16.mxu0 %v755
        %881 = vmatpush1.bf16.msra.mxu0 %v754
        %882 = vmatprep.subr.bf16.mxu0 %v759
        %883 = vmatpush1.bf16.msra.mxu0 %v758
        %884 = vmatprep.subr.bf16.mxu0 %v763
        %885 = vmatpush1.bf16.msra.mxu0 %v762
        %886 = vmatprep.subr.bf16.mxu0 %v767
        %887 = vmatpush1.bf16.msra.mxu0 %v766
        %888 = vmatprep.subr.bf16.mxu0 %v771
        %889 = vmatpush1.bf16.msra.mxu0 %v770
        %890 = vmatprep.subr.bf16.mxu0 %v775
        %891 = vmatpush1.bf16.msra.mxu0 %v774
        %892 = vmatprep.subr.bf16.mxu0 %v779
        %893 = vmatpush1.bf16.msra.mxu0 %v778
        %894 = vmatprep.subr.bf16.mxu0 %v783
        %895 = vmatpush1.bf16.msra.mxu0 %v782
        %896 = vmatprep.subr.bf16.mxu0 %v787
        %897 = vmatpush1.bf16.msra.mxu0 %v786
        %898 = vmatprep.subr.bf16.mxu0 %v791
        %899 = vmatpush1.bf16.msra.mxu0 %v790
        %900 = vmatprep.subr.bf16.mxu0 %v795
        %901 = vmatpush1.bf16.msra.mxu0 %v794
        %902 = vmatprep.subr.bf16.mxu0 %v799
        %903 = vmatpush1.bf16.msra.mxu0 %v798
        %904 = vmatprep.subr.bf16.mxu0 %v803
        %905 = vmatpush1.bf16.msra.mxu0 %v802
        %906 = vmatprep.subr.bf16.mxu0 %v807
        %907 = vmatpush1.bf16.msra.mxu0 %v806
        %908 = vmatprep.subr.bf16.mxu0 %v811
        %909 = vmatpush1.bf16.msra.mxu0 %v810
        %910 = vmatprep.mubr.bf16.mxu0 %v457
        %911 = vmatmul.mubr.bf16.gmra.mrb[0].mxu0 %v456
        %v912 = vpop.f32.mrb[0].mxu0
        %v913 = vadd.f32 %v541, %v912
        %v914 = vpop.f32.mrb[0].mxu0
        %v915 = vadd.f32 %v545, %v914
        %v916 = vpop.f32.mrb[0].mxu0
        %v917 = vadd.f32 %v541, %v916
        %v918 = vpop.f32.mrb[0].mxu0
        %v919 = vadd.f32 %v545, %v918
        %920 = vmatprep.mubr.bf16.mxu0 %v459
        %921 = vmatmul.mubr.bf16.gmra.mrb[0].mxu0 %v458
        %v922 = vpop.f32.mrb[0].mxu0
        %v923 = vadd.f32 %v541, %v922
        %v924 = vpop.f32.mrb[0].mxu0
        %v925 = vadd.f32 %v545, %v924
        %v926 = vpop.f32.mrb[0].mxu0
        %v927 = vadd.f32 %v541, %v926
        %v928 = vpop.f32.mrb[0].mxu0
        %v929 = vadd.f32 %v545, %v928
        %930 = vmatprep.mubr.bf16.mxu0 %v461
        %931 = vmatmul.mubr.bf16.gmra.mrb[0].mxu0 %v460
        %v932 = vpop.f32.mrb[0].mxu0
        %v933 = vadd.f32 %v541, %v932
        %v934 = vpop.f32.mrb[0].mxu0
        %v935 = vadd.f32 %v545, %v934
        %v936 = vpop.f32.mrb[0].mxu0
        %v937 = vadd.f32 %v541, %v936
        %v938 = vpop.f32.mrb[0].mxu0
        %v939 = vadd.f32 %v545, %v938
        %940 = vmatprep.mubr.bf16.mxu0 %v463
        %941 = vmatmul.mubr.bf16.gmra.mrb[0].mxu0 %v462
        %v942 = vpop.f32.mrb[0].mxu0
        %v943 = vadd.f32 %v541, %v942
        %v944 = vpop.f32.mrb[0].mxu0
        %v945 = vadd.f32 %v545, %v944
        %v946 = vpop.f32.mrb[0].mxu0
        %v947 = vadd.f32 %v541, %v946
        %v948 = vpop.f32.mrb[0].mxu0
        %v949 = vadd.f32 %v545, %v948
        %950 = vmatprep.mubr.bf16.mxu0 %v465
        %951 = vmatmul.mubr.bf16.gmra.mrb[0].mxu0 %v464
        %v952 = vpop.f32.mrb[0].mxu0
        %v953 = vadd.f32 %v541, %v952
        %v954 = vpop.f32.mrb[0].mxu0
        %v955 = vadd.f32 %v545, %v954
        %v956 = vpop.f32.mrb[0].mxu0
        %v957 = vadd.f32 %v541, %v956
        %v958 = vpop.f32.mrb[0].mxu0
        %v959 = vadd.f32 %v545, %v958
        %960 = vmatprep.mubr.bf16.mxu0 %v467
        %961 = vmatmul.mubr.bf16.gmra.mrb[0].mxu0 %v466
        %v962 = vpop.f32.mrb[0].mxu0
        %v963 = vadd.f32 %v541, %v962
        %v964 = vpop.f32.mrb[0].mxu0
        %v965 = vadd.f32 %v545, %v964
        %v966 = vpop.f32.mrb[0].mxu0
        %v967 = vadd.f32 %v541, %v966
        %v968 = vpop.f32.mrb[0].mxu0
        %v969 = vadd.f32 %v545, %v968
        %970 = vmatprep.mubr.bf16.mxu0 %v469
        %971 = vmatmul.mubr.bf16.gmra.mrb[0].mxu0 %v468
        %v972 = vpop.f32.mrb[0].mxu0
        %v973 = vadd.f32 %v541, %v972
        %v974 = vpop.f32.mrb[0].mxu0
        %v975 = vadd.f32 %v545, %v974
        %v976 = vpop.f32.mrb[0].mxu0
        %v977 = vadd.f32 %v541, %v976
        %v978 = vpop.f32.mrb[0].mxu0
        %v979 = vadd.f32 %v545, %v978
        %980 = vmatprep.mubr.bf16.mxu0 %v471
        %981 = vmatmul.mubr.bf16.gmra.mrb[0].mxu0 %v470
        %v982 = vpop.f32.mrb[0].mxu0
        %v983 = vadd.f32 %v541, %v982
        %v984 = vpop.f32.mrb[0].mxu0
        %v985 = vadd.f32 %v545, %v984
        %v986 = vpop.f32.mrb[0].mxu0
        %v987 = vadd.f32 %v541, %v986
        %v988 = vpop.f32.mrb[0].mxu0
        %v989 = vadd.f32 %v545, %v988
        %990 = vdwg.mxu0
        %991 = vmatprep.subr.bf16.mxu0 %v753
        %992 = vmatpush1.bf16.msra.mxu0 %v752
        %993 = vmatprep.subr.bf16.mxu0 %v757
        %994 = vmatpush1.bf16.msra.mxu0 %v756
        %995 = vmatprep.subr.bf16.mxu0 %v761
        %996 = vmatpush1.bf16.msra.mxu0 %v760
        %997 = vmatprep.subr.bf16.mxu0 %v765
        %998 = vmatpush1.bf16.msra.mxu0 %v764
        %999 = vmatprep.subr.bf16.mxu0 %v769
        %1000 = vmatpush1.bf16.msra.mxu0 %v768
        %1001 = vmatprep.subr.bf16.mxu0 %v773
        %1002 = vmatpush1.bf16.msra.mxu0 %v772
        %1003 = vmatprep.subr.bf16.mxu0 %v777
        %1004 = vmatpush1.bf16.msra.mxu0 %v776
        %1005 = vmatprep.subr.bf16.mxu0 %v781
        %1006 = vmatpush1.bf16.msra.mxu0 %v780
        %1007 = vmatprep.subr.bf16.mxu0 %v785
        %1008 = vmatpush1.bf16.msra.mxu0 %v784
        %1009 = vmatprep.subr.bf16.mxu0 %v789
        %1010 = vmatpush1.bf16.msra.mxu0 %v788
        %1011 = vmatprep.subr.bf16.mxu0 %v793
        %1012 = vmatpush1.bf16.msra.mxu0 %v792
        %1013 = vmatprep.subr.bf16.mxu0 %v797
        %1014 = vmatpush1.bf16.msra.mxu0 %v796
        %1015 = vmatprep.subr.bf16.mxu0 %v801
        %1016 = vmatpush1.bf16.msra.mxu0 %v800
        %1017 = vmatprep.subr.bf16.mxu0 %v805
        %1018 = vmatpush1.bf16.msra.mxu0 %v804
        %1019 = vmatprep.subr.bf16.mxu0 %v809
        %1020 = vmatpush1.bf16.msra.mxu0 %v808
        %1021 = vmatprep.subr.bf16.mxu0 %v813
        %1022 = vmatpush1.bf16.msra.mxu0 %v812
        %1023 = vmatprep.mubr.bf16.mxu0 %v457
        %1024 = vmatmul.mubr.bf16.gmra.mrb[0].mxu0 %v456
        %v1025 = vpop.f32.mrb[0].mxu0
        %v1026 = vadd.f32 %v549, %v1025
        %v1027 = vpop.f32.mrb[0].mxu0
        %v1028 = vadd.f32 %v553, %v1027
        %v1029 = vpop.f32.mrb[0].mxu0
        %v1030 = vadd.f32 %v549, %v1029
        %v1031 = vpop.f32.mrb[0].mxu0
        %v1032 = vadd.f32 %v553, %v1031
        %1033 = vmatprep.mubr.bf16.mxu0 %v459
        %1034 = vmatmul.mubr.bf16.gmra.mrb[0].mxu0 %v458
        %v1035 = vpop.f32.mrb[0].mxu0
        %v1036 = vadd.f32 %v549, %v1035
        %v1037 = vpop.f32.mrb[0].mxu0
        %v1038 = vadd.f32 %v553, %v1037
        %v1039 = vpop.f32.mrb[0].mxu0
        %v1040 = vadd.f32 %v549, %v1039
        %v1041 = vpop.f32.mrb[0].mxu0
        %v1042 = vadd.f32 %v553, %v1041
        %1043 = vmatprep.mubr.bf16.mxu0 %v461
        %1044 = vmatmul.mubr.bf16.gmra.mrb[0].mxu0 %v460
        %v1045 = vpop.f32.mrb[0].mxu0
        %v1046 = vadd.f32 %v549, %v1045
        %v1047 = vpop.f32.mrb[0].mxu0
        %v1048 = vadd.f32 %v553, %v1047
        %v1049 = vpop.f32.mrb[0].mxu0
        %v1050 = vadd.f32 %v549, %v1049
        %v1051 = vpop.f32.mrb[0].mxu0
        %v1052 = vadd.f32 %v553, %v1051
        %1053 = vmatprep.mubr.bf16.mxu0 %v463
        %1054 = vmatmul.mubr.bf16.gmra.mrb[0].mxu0 %v462
        %v1055 = vpop.f32.mrb[0].mxu0
        %v1056 = vadd.f32 %v549, %v1055
        %v1057 = vpop.f32.mrb[0].mxu0
        %v1058 = vadd.f32 %v553, %v1057
        %v1059 = vpop.f32.mrb[0].mxu0
        %v1060 = vadd.f32 %v549, %v1059
        %v1061 = vpop.f32.mrb[0].mxu0
        %v1062 = vadd.f32 %v553, %v1061
        %1063 = vmatprep.mubr.bf16.mxu0 %v465
        %1064 = vmatmul.mubr.bf16.gmra.mrb[0].mxu0 %v464
        %v1065 = vpop.f32.mrb[0].mxu0
        %v1066 = vadd.f32 %v549, %v1065
        %v1067 = vpop.f32.mrb[0].mxu0
        %v1068 = vadd.f32 %v553, %v1067
        %v1069 = vpop.f32.mrb[0].mxu0
        %v1070 = vadd.f32 %v549, %v1069
        %v1071 = vpop.f32.mrb[0].mxu0
        %v1072 = vadd.f32 %v553, %v1071
        %1073 = vmatprep.mubr.bf16.mxu0 %v467
        %1074 = vmatmul.mubr.bf16.gmra.mrb[0].mxu0 %v466
        %v1075 = vpop.f32.mrb[0].mxu0
        %v1076 = vadd.f32 %v549, %v1075
        %v1077 = vpop.f32.mrb[0].mxu0
        %v1078 = vadd.f32 %v553, %v1077
        %v1079 = vpop.f32.mrb[0].mxu0
        %v1080 = vadd.f32 %v549, %v1079
        %v1081 = vpop.f32.mrb[0].mxu0
        %v1082 = vadd.f32 %v553, %v1081
        %1083 = vmatprep.mubr.bf16.mxu0 %v469
        %1084 = vmatmul.mubr.bf16.gmra.mrb[0].mxu0 %v468
        %v1085 = vpop.f32.mrb[0].mxu0
        %v1086 = vadd.f32 %v549, %v1085
        %v1087 = vpop.f32.mrb[0].mxu0
        %v1088 = vadd.f32 %v553, %v1087
        %v1089 = vpop.f32.mrb[0].mxu0
        %v1090 = vadd.f32 %v549, %v1089
        %v1091 = vpop.f32.mrb[0].mxu0
        %v1092 = vadd.f32 %v553, %v1091
        %1093 = vmatprep.mubr.bf16.mxu0 %v471
        %1094 = vmatmul.mubr.bf16.gmra.mrb[0].mxu0 %v470
        %v1095 = vpop.f32.mrb[0].mxu0
        %v1096 = vadd.f32 %v549, %v1095
        %v1097 = vpop.f32.mrb[0].mxu0
        %v1098 = vadd.f32 %v553, %v1097
        %v1099 = vpop.f32.mrb[0].mxu0
        %v1100 = vadd.f32 %v549, %v1099
        %v1101 = vpop.f32.mrb[0].mxu0
        %v1102 = vadd.f32 %v553, %v1101
        %1103 = vdwg.mxu0
        %v1104 = vadd.f32 %v913, %v917
        %v1105 = vadd.f32 %v1104, %v923
        %v1106 = vadd.f32 %v1105, %v927
        %v1107 = vadd.f32 %v1106, %v933
        %v1108 = vadd.f32 %v1107, %v937
        %v1109 = vadd.f32 %v1108, %v943
        %v1110 = vadd.f32 %v1109, %v947
        %v1111 = vadd.f32 %v1110, %v953
        %v1112 = vadd.f32 %v1111, %v957
        %v1113 = vadd.f32 %v1112, %v963
        %v1114 = vadd.f32 %v1113, %v967
        %v1115 = vadd.f32 %v1114, %v973
        %v1116 = vadd.f32 %v1115, %v977
        %v1117 = vadd.f32 %v1116, %v983
        %v1118 = vadd.f32 %v1117, %v987
        %v1119 = vrot.slane %v1118, 4
        %v1120 = vadd.f32 %v1118, %v1119
        %v1121 = vrot.slane %v1120, 2
        %v1122 = vadd.f32 %v1120, %v1121
        %v1123 = vrot.slane %v1122, 1
        %v1124 = vadd.f32 %v1122, %v1123
        %v1125 = vadd.f32 %v915, %v919
        %v1126 = vadd.f32 %v1125, %v925
        %v1127 = vadd.f32 %v1126, %v929
        %v1128 = vadd.f32 %v1127, %v935
        %v1129 = vadd.f32 %v1128, %v939
        %v1130 = vadd.f32 %v1129, %v945
        %v1131 = vadd.f32 %v1130, %v949
        %v1132 = vadd.f32 %v1131, %v955
        %v1133 = vadd.f32 %v1132, %v959
        %v1134 = vadd.f32 %v1133, %v965
        %v1135 = vadd.f32 %v1134, %v969
        %v1136 = vadd.f32 %v1135, %v975
        %v1137 = vadd.f32 %v1136, %v979
        %v1138 = vadd.f32 %v1137, %v985
        %v1139 = vadd.f32 %v1138, %v989
        %v1140 = vrot.slane %v1139, 4
        %v1141 = vadd.f32 %v1139, %v1140
        %v1142 = vrot.slane %v1141, 2
        %v1143 = vadd.f32 %v1141, %v1142
        %v1144 = vrot.slane %v1143, 1
        %v1145 = vadd.f32 %v1143, %v1144
        %v1146 = vadd.f32 %v1026, %v1030
        %v1147 = vadd.f32 %v1146, %v1036
        %v1148 = vadd.f32 %v1147, %v1040
        %v1149 = vadd.f32 %v1148, %v1046
        %v1150 = vadd.f32 %v1149, %v1050
        %v1151 = vadd.f32 %v1150, %v1056
        %v1152 = vadd.f32 %v1151, %v1060
        %v1153 = vadd.f32 %v1152, %v1066
        %v1154 = vadd.f32 %v1153, %v1070
        %v1155 = vadd.f32 %v1154, %v1076
        %v1156 = vadd.f32 %v1155, %v1080
        %v1157 = vadd.f32 %v1156, %v1086
        %v1158 = vadd.f32 %v1157, %v1090
        %v1159 = vadd.f32 %v1158, %v1096
        %v1160 = vadd.f32 %v1159, %v1100
        %v1161 = vrot.slane %v1160, 4
        %v1162 = vadd.f32 %v1160, %v1161
        %v1163 = vrot.slane %v1162, 2
        %v1164 = vadd.f32 %v1162, %v1163
        %v1165 = vrot.slane %v1164, 1
        %v1166 = vadd.f32 %v1164, %v1165
        %v1167 = vadd.f32 %v1028, %v1032
        %v1168 = vadd.f32 %v1167, %v1038
        %v1169 = vadd.f32 %v1168, %v1042
        %v1170 = vadd.f32 %v1169, %v1048
        %v1171 = vadd.f32 %v1170, %v1052
        %v1172 = vadd.f32 %v1171, %v1058
        %v1173 = vadd.f32 %v1172, %v1062
        %v1174 = vadd.f32 %v1173, %v1068
        %v1175 = vadd.f32 %v1174, %v1072
        %v1176 = vadd.f32 %v1175, %v1078
        %v1177 = vadd.f32 %v1176, %v1082
        %v1178 = vadd.f32 %v1177, %v1088
        %v1179 = vadd.f32 %v1178, %v1092
        %v1180 = vadd.f32 %v1179, %v1098
        %v1181 = vadd.f32 %v1180, %v1102
        %v1182 = vrot.slane %v1181, 4
        %v1183 = vadd.f32 %v1181, %v1182
        %v1184 = vrot.slane %v1183, 2
        %v1185 = vadd.f32 %v1183, %v1184
        %v1186 = vrot.slane %v1185, 1
        %v1187 = vadd.f32 %v1185, %v1186
        %v1192 = vcombine.low %v1124, %v1145
        %v1193 = vcombine.low %v1166, %v1187
        %v1195 = vunpack.c.l.s4 1966171168
        %v1196 = vunpack.c.0.s8 %v1195
        %v1197 = vlaneseq
        %v1198 = vshrl.u32 %v1197, 7
        %v1199 = vsub.s32 %v1196, %v1198
        %v1200 = vrot.slane %v1192, %v1199
        %v1202 = vunpack.c.l.s4 1966171168
        %v1203 = vunpack.c.0.s8 %v1202
        %v1204 = vlaneseq
        %v1205 = vshrl.u32 %v1204, 7
        %v1206 = vsub.s32 %v1203, %v1205
        %v1207 = vrot.slane %v1193, %v1206
        %v1208 = vcombine.low %v1200, %v1207
        %v1210 = vunpack.c.l.s4 1966171168
        %v1211 = vunpack.c.0.s8 %v1210
        %v1212 = vlaneseq
        %v1213 = vshrl.u32 %v1212, 7
        %v1214 = vsub.s32 %v1211, %v1213
        %v1215 = vrot.slane %v1208, %v1214
        %v1217 = vlaneseq
        %vm1218 = vcmp.ge.s32.totalorder %v1217, 0
        %vm1219 = vcmp.lt.s32.totalorder %v1217, 512
        %vm1220 = vmand %vm1218, %vm1219
        %1221 = vst.msk [vmem:[%s287] ss:$2 sm:$0xf] %vm1220, %v1215
        %v1222 = vmul.f32 %v913, %v913
        %v1223 = vmul.f32 %v915, %v915
        %v1224 = vmul.f32 %v1026, %v1026
        %v1225 = vmul.f32 %v1028, %v1028
        %v1226 = vmul.f32 %v917, %v917
        %v1227 = vmul.f32 %v919, %v919
        %v1228 = vmul.f32 %v1030, %v1030
        %v1229 = vmul.f32 %v1032, %v1032
        %v1230 = vmul.f32 %v923, %v923
        %v1231 = vmul.f32 %v925, %v925
        %v1232 = vmul.f32 %v1036, %v1036
        %v1233 = vmul.f32 %v1038, %v1038
        %v1234 = vmul.f32 %v927, %v927
        %v1235 = vmul.f32 %v929, %v929
        %v1236 = vmul.f32 %v1040, %v1040
        %v1237 = vmul.f32 %v1042, %v1042
        %v1238 = vmul.f32 %v933, %v933
        %v1239 = vmul.f32 %v935, %v935
        %v1240 = vmul.f32 %v1046, %v1046
        %v1241 = vmul.f32 %v1048, %v1048
        %v1242 = vmul.f32 %v937, %v937
        %v1243 = vmul.f32 %v939, %v939
        %v1244 = vmul.f32 %v1050, %v1050
        %v1245 = vmul.f32 %v1052, %v1052
        %v1246 = vmul.f32 %v943, %v943
        %v1247 = vmul.f32 %v945, %v945
        %v1248 = vmul.f32 %v1056, %v1056
        %v1249 = vmul.f32 %v1058, %v1058
        %v1250 = vmul.f32 %v947, %v947
        %v1251 = vmul.f32 %v949, %v949
        %v1252 = vmul.f32 %v1060, %v1060
        %v1253 = vmul.f32 %v1062, %v1062
        %v1254 = vmul.f32 %v953, %v953
        %v1255 = vmul.f32 %v955, %v955
        %v1256 = vmul.f32 %v1066, %v1066
        %v1257 = vmul.f32 %v1068, %v1068
        %v1258 = vmul.f32 %v957, %v957
        %v1259 = vmul.f32 %v959, %v959
        %v1260 = vmul.f32 %v1070, %v1070
        %v1261 = vmul.f32 %v1072, %v1072
        %v1262 = vmul.f32 %v963, %v963
        %v1263 = vmul.f32 %v965, %v965
        %v1264 = vmul.f32 %v1076, %v1076
        %v1265 = vmul.f32 %v1078, %v1078
        %v1266 = vmul.f32 %v967, %v967
        %v1267 = vmul.f32 %v969, %v969
        %v1268 = vmul.f32 %v1080, %v1080
        %v1269 = vmul.f32 %v1082, %v1082
        %v1270 = vmul.f32 %v973, %v973
        %v1271 = vmul.f32 %v975, %v975
        %v1272 = vmul.f32 %v1086, %v1086
        %v1273 = vmul.f32 %v1088, %v1088
        %v1274 = vmul.f32 %v977, %v977
        %v1275 = vmul.f32 %v979, %v979
        %v1276 = vmul.f32 %v1090, %v1090
        %v1277 = vmul.f32 %v1092, %v1092
        %v1278 = vmul.f32 %v983, %v983
        %v1279 = vmul.f32 %v985, %v985
        %v1280 = vmul.f32 %v1096, %v1096
        %v1281 = vmul.f32 %v1098, %v1098
        %v1282 = vmul.f32 %v987, %v987
        %v1283 = vmul.f32 %v989, %v989
        %v1284 = vmul.f32 %v1100, %v1100
        %v1285 = vmul.f32 %v1102, %v1102
        %v1286 = vadd.f32 %v1222, %v1226
        %v1287 = vadd.f32 %v1286, %v1230
        %v1288 = vadd.f32 %v1287, %v1234
        %v1289 = vadd.f32 %v1288, %v1238
        %v1290 = vadd.f32 %v1289, %v1242
        %v1291 = vadd.f32 %v1290, %v1246
        %v1292 = vadd.f32 %v1291, %v1250
        %v1293 = vadd.f32 %v1292, %v1254
        %v1294 = vadd.f32 %v1293, %v1258
        %v1295 = vadd.f32 %v1294, %v1262
        %v1296 = vadd.f32 %v1295, %v1266
        %v1297 = vadd.f32 %v1296, %v1270
        %v1298 = vadd.f32 %v1297, %v1274
        %v1299 = vadd.f32 %v1298, %v1278
        %v1300 = vadd.f32 %v1299, %v1282
        %v1301 = vrot.slane %v1300, 4
        %v1302 = vadd.f32 %v1300, %v1301
        %v1303 = vrot.slane %v1302, 2
        %v1304 = vadd.f32 %v1302, %v1303
        %v1305 = vrot.slane %v1304, 1
        %v1306 = vadd.f32 %v1304, %v1305
        %v1307 = vadd.f32 %v1223, %v1227
        %v1308 = vadd.f32 %v1307, %v1231
        %v1309 = vadd.f32 %v1308, %v1235
        %v1310 = vadd.f32 %v1309, %v1239
        %v1311 = vadd.f32 %v1310, %v1243
        %v1312 = vadd.f32 %v1311, %v1247
        %v1313 = vadd.f32 %v1312, %v1251
        %v1314 = vadd.f32 %v1313, %v1255
        %v1315 = vadd.f32 %v1314, %v1259
        %v1316 = vadd.f32 %v1315, %v1263
        %v1317 = vadd.f32 %v1316, %v1267
        %v1318 = vadd.f32 %v1317, %v1271
        %v1319 = vadd.f32 %v1318, %v1275
        %v1320 = vadd.f32 %v1319, %v1279
        %v1321 = vadd.f32 %v1320, %v1283
        %v1322 = vrot.slane %v1321, 4
        %v1323 = vadd.f32 %v1321, %v1322
        %v1324 = vrot.slane %v1323, 2
        %v1325 = vadd.f32 %v1323, %v1324
        %v1326 = vrot.slane %v1325, 1
        %v1327 = vadd.f32 %v1325, %v1326
        %v1328 = vadd.f32 %v1224, %v1228
        %v1329 = vadd.f32 %v1328, %v1232
        %v1330 = vadd.f32 %v1329, %v1236
        %v1331 = vadd.f32 %v1330, %v1240
        %v1332 = vadd.f32 %v1331, %v1244
        %v1333 = vadd.f32 %v1332, %v1248
        %v1334 = vadd.f32 %v1333, %v1252
        %v1335 = vadd.f32 %v1334, %v1256
        %v1336 = vadd.f32 %v1335, %v1260
        %v1337 = vadd.f32 %v1336, %v1264
        %v1338 = vadd.f32 %v1337, %v1268
        %v1339 = vadd.f32 %v1338, %v1272
        %v1340 = vadd.f32 %v1339, %v1276
        %v1341 = vadd.f32 %v1340, %v1280
        %v1342 = vadd.f32 %v1341, %v1284
        %v1343 = vrot.slane %v1342, 4
        %v1344 = vadd.f32 %v1342, %v1343
        %v1345 = vrot.slane %v1344, 2
        %v1346 = vadd.f32 %v1344, %v1345
        %v1347 = vrot.slane %v1346, 1
        %v1348 = vadd.f32 %v1346, %v1347
        %v1349 = vadd.f32 %v1225, %v1229
        %v1350 = vadd.f32 %v1349, %v1233
        %v1351 = vadd.f32 %v1350, %v1237
        %v1352 = vadd.f32 %v1351, %v1241
        %v1353 = vadd.f32 %v1352, %v1245
        %v1354 = vadd.f32 %v1353, %v1249
        %v1355 = vadd.f32 %v1354, %v1253
        %v1356 = vadd.f32 %v1355, %v1257
        %v1357 = vadd.f32 %v1356, %v1261
        %v1358 = vadd.f32 %v1357, %v1265
        %v1359 = vadd.f32 %v1358, %v1269
        %v1360 = vadd.f32 %v1359, %v1273
        %v1361 = vadd.f32 %v1360, %v1277
        %v1362 = vadd.f32 %v1361, %v1281
        %v1363 = vadd.f32 %v1362, %v1285
        %v1364 = vrot.slane %v1363, 4
        %v1365 = vadd.f32 %v1363, %v1364
        %v1366 = vrot.slane %v1365, 2
        %v1367 = vadd.f32 %v1365, %v1366
        %v1368 = vrot.slane %v1367, 1
        %v1369 = vadd.f32 %v1367, %v1368
        %v1374 = vcombine.low %v1306, %v1327
        %v1375 = vcombine.low %v1348, %v1369
        %v1377 = vunpack.c.l.s4 1966171168
        %v1378 = vunpack.c.0.s8 %v1377
        %v1379 = vlaneseq
        %v1380 = vshrl.u32 %v1379, 7
        %v1381 = vsub.s32 %v1378, %v1380
        %v1382 = vrot.slane %v1374, %v1381
        %v1384 = vunpack.c.l.s4 1966171168
        %v1385 = vunpack.c.0.s8 %v1384
        %v1386 = vlaneseq
        %v1387 = vshrl.u32 %v1386, 7
        %v1388 = vsub.s32 %v1385, %v1387
        %v1389 = vrot.slane %v1375, %v1388
        %v1390 = vcombine.low %v1382, %v1389
        %v1392 = vunpack.c.l.s4 1966171168
        %v1393 = vunpack.c.0.s8 %v1392
        %v1394 = vlaneseq
        %v1395 = vshrl.u32 %v1394, 7
        %v1396 = vsub.s32 %v1393, %v1395
        %v1397 = vrot.slane %v1390, %v1396
        %s1399 = scalar_lea.vmem %s287, 1
        %1400 = vst.msk [vmem:[%s1399] ss:$2 sm:$0xf] %vm1220, %v1397
        %v1401 = vpack.c.bf16 %v917, %v913
        %v1402 = vpack.c.bf16 %v919, %v915
        %v1403 = vpack.c.bf16 %v1030, %v1026
        %v1404 = vpack.c.bf16 %v1032, %v1028
        %v1405 = vpack.c.bf16 %v927, %v923
        %v1406 = vpack.c.bf16 %v929, %v925
        %v1407 = vpack.c.bf16 %v1040, %v1036
        %v1408 = vpack.c.bf16 %v1042, %v1038
        %v1409 = vpack.c.bf16 %v937, %v933
        %v1410 = vpack.c.bf16 %v939, %v935
        %v1411 = vpack.c.bf16 %v1050, %v1046
        %v1412 = vpack.c.bf16 %v1052, %v1048
        %v1413 = vpack.c.bf16 %v947, %v943
        %v1414 = vpack.c.bf16 %v949, %v945
        %v1415 = vpack.c.bf16 %v1060, %v1056
        %v1416 = vpack.c.bf16 %v1062, %v1058
        %v1417 = vpack.c.bf16 %v957, %v953
        %v1418 = vpack.c.bf16 %v959, %v955
        %v1419 = vpack.c.bf16 %v1070, %v1066
        %v1420 = vpack.c.bf16 %v1072, %v1068
        %v1421 = vpack.c.bf16 %v967, %v963
        %v1422 = vpack.c.bf16 %v969, %v965
        %v1423 = vpack.c.bf16 %v1080, %v1076
        %v1424 = vpack.c.bf16 %v1082, %v1078
        %v1425 = vpack.c.bf16 %v977, %v973
        %v1426 = vpack.c.bf16 %v979, %v975
        %v1427 = vpack.c.bf16 %v1090, %v1086
        %v1428 = vpack.c.bf16 %v1092, %v1088
        %v1429 = vpack.c.bf16 %v987, %v983
        %v1430 = vpack.c.bf16 %v989, %v985
        %v1431 = vpack.c.bf16 %v1100, %v1096
        %v1432 = vpack.c.bf16 %v1102, %v1098
        %v1465 = vunpack.c.l.b16 %v1401
        %v1466 = vunpack.c.l.b16 %v1402
        %v1467 = vunpack.c.l.b16 %v1403
        %v1468 = vunpack.c.l.b16 %v1404
        %v1469 = vunpack.c.h.b16 %v1401
        %v1470 = vunpack.c.h.b16 %v1402
        %v1471 = vunpack.c.h.b16 %v1403
        %v1472 = vunpack.c.h.b16 %v1404
        %v1473 = vunpack.c.l.b16 %v1405
        %v1474 = vunpack.c.l.b16 %v1406
        %v1475 = vunpack.c.l.b16 %v1407
        %v1476 = vunpack.c.l.b16 %v1408
        %v1477 = vunpack.c.h.b16 %v1405
        %v1478 = vunpack.c.h.b16 %v1406
        %v1479 = vunpack.c.h.b16 %v1407
        %v1480 = vunpack.c.h.b16 %v1408
        %v1481 = vunpack.c.l.b16 %v1409
        %v1482 = vunpack.c.l.b16 %v1410
        %v1483 = vunpack.c.l.b16 %v1411
        %v1484 = vunpack.c.l.b16 %v1412
        %v1485 = vunpack.c.h.b16 %v1409
        %v1486 = vunpack.c.h.b16 %v1410
        %v1487 = vunpack.c.h.b16 %v1411
        %v1488 = vunpack.c.h.b16 %v1412
        %v1489 = vunpack.c.l.b16 %v1413
        %v1490 = vunpack.c.l.b16 %v1414
        %v1491 = vunpack.c.l.b16 %v1415
        %v1492 = vunpack.c.l.b16 %v1416
        %v1493 = vunpack.c.h.b16 %v1413
        %v1494 = vunpack.c.h.b16 %v1414
        %v1495 = vunpack.c.h.b16 %v1415
        %v1496 = vunpack.c.h.b16 %v1416
        %v1497 = vunpack.c.l.b16 %v1417
        %v1498 = vunpack.c.l.b16 %v1418
        %v1499 = vunpack.c.l.b16 %v1419
        %v1500 = vunpack.c.l.b16 %v1420
        %v1501 = vunpack.c.h.b16 %v1417
        %v1502 = vunpack.c.h.b16 %v1418
        %v1503 = vunpack.c.h.b16 %v1419
        %v1504 = vunpack.c.h.b16 %v1420
        %v1505 = vunpack.c.l.b16 %v1421
        %v1506 = vunpack.c.l.b16 %v1422
        %v1507 = vunpack.c.l.b16 %v1423
        %v1508 = vunpack.c.l.b16 %v1424
        %v1509 = vunpack.c.h.b16 %v1421
        %v1510 = vunpack.c.h.b16 %v1422
        %v1511 = vunpack.c.h.b16 %v1423
        %v1512 = vunpack.c.h.b16 %v1424
        %v1513 = vunpack.c.l.b16 %v1425
        %v1514 = vunpack.c.l.b16 %v1426
        %v1515 = vunpack.c.l.b16 %v1427
        %v1516 = vunpack.c.l.b16 %v1428
        %v1517 = vunpack.c.h.b16 %v1425
        %v1518 = vunpack.c.h.b16 %v1426
        %v1519 = vunpack.c.h.b16 %v1427
        %v1520 = vunpack.c.h.b16 %v1428
        %v1521 = vunpack.c.l.b16 %v1429
        %v1522 = vunpack.c.l.b16 %v1430
        %v1523 = vunpack.c.l.b16 %v1431
        %v1524 = vunpack.c.l.b16 %v1432
        %v1525 = vunpack.c.h.b16 %v1429
        %v1526 = vunpack.c.h.b16 %v1430
        %v1527 = vunpack.c.h.b16 %v1431
        %v1528 = vunpack.c.h.b16 %v1432
        %v1529 = vpack.c.b16 %v1466, %v1465
        %v1530 = vpack.c.b16 %v1468, %v1467
        %v1531 = vpack.c.b16 %v1470, %v1469
        %v1532 = vpack.c.b16 %v1472, %v1471
        %v1533 = vpack.c.b16 %v1474, %v1473
        %v1534 = vpack.c.b16 %v1476, %v1475
        %v1535 = vpack.c.b16 %v1478, %v1477
        %v1536 = vpack.c.b16 %v1480, %v1479
        %v1537 = vpack.c.b16 %v1482, %v1481
        %v1538 = vpack.c.b16 %v1484, %v1483
        %v1539 = vpack.c.b16 %v1486, %v1485
        %v1540 = vpack.c.b16 %v1488, %v1487
        %v1541 = vpack.c.b16 %v1490, %v1489
        %v1542 = vpack.c.b16 %v1492, %v1491
        %v1543 = vpack.c.b16 %v1494, %v1493
        %v1544 = vpack.c.b16 %v1496, %v1495
        %v1545 = vpack.c.b16 %v1498, %v1497
        %v1546 = vpack.c.b16 %v1500, %v1499
        %v1547 = vpack.c.b16 %v1502, %v1501
        %v1548 = vpack.c.b16 %v1504, %v1503
        %v1549 = vpack.c.b16 %v1506, %v1505
        %v1550 = vpack.c.b16 %v1508, %v1507
        %v1551 = vpack.c.b16 %v1510, %v1509
        %v1552 = vpack.c.b16 %v1512, %v1511
        %v1553 = vpack.c.b16 %v1514, %v1513
        %v1554 = vpack.c.b16 %v1516, %v1515
        %v1555 = vpack.c.b16 %v1518, %v1517
        %v1556 = vpack.c.b16 %v1520, %v1519
        %v1557 = vpack.c.b16 %v1522, %v1521
        %v1558 = vpack.c.b16 %v1524, %v1523
        %v1559 = vpack.c.b16 %v1526, %v1525
        %v1560 = vpack.c.b16 %v1528, %v1527
        %1593 = vst [vmem:[%s281] sm:$0xff] %v1529
        %1594 = vst [vmem:[%s281 + $0x8] sm:$0xff] %v1530
        %1595 = vst [vmem:[%s281 + $0x10] sm:$0xff] %v1531
        %1596 = vst [vmem:[%s281 + $0x18] sm:$0xff] %v1532
        %1597 = vst [vmem:[%s281 + $0x20] sm:$0xff] %v1533
        %1598 = vst [vmem:[%s281 + $0x28] sm:$0xff] %v1534
        %1599 = vst [vmem:[%s281 + $0x30] sm:$0xff] %v1535
        %1600 = vst [vmem:[%s281 + $0x38] sm:$0xff] %v1536
        %1601 = vst [vmem:[%s281 + $0x40] sm:$0xff] %v1537
        %1602 = vst [vmem:[%s281 + $0x48] sm:$0xff] %v1538
        %1603 = vst [vmem:[%s281 + $0x50] sm:$0xff] %v1539
        %1604 = vst [vmem:[%s281 + $0x58] sm:$0xff] %v1540
        %1605 = vst [vmem:[%s281 + $0x60] sm:$0xff] %v1541
        %1606 = vst [vmem:[%s281 + $0x68] sm:$0xff] %v1542
        %1607 = vst [vmem:[%s281 + $0x70] sm:$0xff] %v1543
        %1608 = vst [vmem:[%s281 + $0x78] sm:$0xff] %v1544
        %1609 = vst [vmem:[%s281 + $0x80] sm:$0xff] %v1545
        %1610 = vst [vmem:[%s281 + $0x88] sm:$0xff] %v1546
        %1611 = vst [vmem:[%s281 + $0x90] sm:$0xff] %v1547
        %1612 = vst [vmem:[%s281 + $0x98] sm:$0xff] %v1548
        %1613 = vst [vmem:[%s281 + $0xa0] sm:$0xff] %v1549
        %1614 = vst [vmem:[%s281 + $0xa8] sm:$0xff] %v1550
        %1615 = vst [vmem:[%s281 + $0xb0] sm:$0xff] %v1551
        %1616 = vst [vmem:[%s281 + $0xb8] sm:$0xff] %v1552
        %1617 = vst [vmem:[%s281 + $0xc0] sm:$0xff] %v1553
        %1618 = vst [vmem:[%s281 + $0xc8] sm:$0xff] %v1554
        %1619 = vst [vmem:[%s281 + $0xd0] sm:$0xff] %v1555
        %1620 = vst [vmem:[%s281 + $0xd8] sm:$0xff] %v1556
        %1621 = vst [vmem:[%s281 + $0xe0] sm:$0xff] %v1557
        %1622 = vst [vmem:[%s281 + $0xe8] sm:$0xff] %v1558
        %1623 = vst [vmem:[%s281 + $0xf0] sm:$0xff] %v1559
        %1624 = vst [vmem:[%s281 + $0xf8] sm:$0xff] %v1560
        %s1625 = smul.u32 16, %s19
        %p1626 = scmp.lt.s32.totalorder %s1625, 31
        %s1627 = scalar_select %p1626, %s1625, 31
        %s1628 = smul.addr %s1627, 4
        %s1629 = smul.addr %s1628, 4
        %s1630 = scalar_lea.vmem %s5, %s1629
        %p1631 = scmp.lt.s32.totalorder %s19, 1
        %s1632 = scalar_select %p1631, %s19, 1
        %s1633 = smul.addr %s1632, 4
        %s1634 = smul.addr %s1633, 2
        %s1635 = scalar_lea.vmem %s6, %s1634
        // Predicated region
        $region45: #{projector_forward.4} parent=39 // pred_check
          %p1636 = pneg %p147
        $region46: #{projector_forward.4} parent=39 // pred_check_branch
          %1638 = sbr.rel (%p1636) target = $region48
        $region47: #{projector_forward.4} parent=39 // pred_region
          %s1639 = smul.u32 16, %s19
        $region48: #{projector_forward.4} parent=39 // pred_fallthru
          _
        // Predicated region
        $region49: #{projector_forward.4} parent=39 // pred_check
          %p1640 = pneg %p173
        $region50: #{projector_forward.4} parent=39 // pred_check_branch
          %1642 = sbr.rel (%p1640) target = $region52
        $region51: #{projector_forward.4} parent=39 // pred_region
          _
        $region52: #{projector_forward.4} parent=39 // pred_fallthru
          _
      $region40: #{projector_forward.4} parent=5 // pred_fallthru
        _
      %p1643 = scmp.le.s32.totalorder 2, %s14
      // Predicated region
      $region53: #{projector_forward.4} parent=5 // pred_check
        %p1644 = pneg %p1643
      $region54: #{projector_forward.4} parent=5 // pred_check_branch
        %1646 = sbr.rel (%p1644) target = $region56
      $region55: #{projector_forward.4} parent=5 // pred_region
        %s1647 = ssub.s32 %s14, 2
        // Predicated region
        $region57: #{projector_forward.4} parent=55 // pred_check
          %p1648 = pneg %p153
        $region58: #{projector_forward.4} parent=55 // pred_check_branch
          %1650 = sbr.rel (%p1648) target = $region60
        $region59: #{projector_forward.4} parent=55 // pred_region
          %s1651 = smul.u32 16, %s20
          %p1652 = scmp.lt.s32.totalorder %s1651, 31
          %s1653 = scalar_select %p1652, %s1651, 31
          %s1654 = smul.addr %s1653, 4
          %s1655 = smul.addr %s1654, 4
          %s1656 = scalar_lea.vmem %s5, %s1655
        $region60: #{projector_forward.4} parent=55 // pred_fallthru
          _
        // Predicated region
        $region61: #{projector_forward.4} parent=55 // pred_check
          %p1657 = pneg %p179
        $region62: #{projector_forward.4} parent=55 // pred_check_branch
          %1659 = sbr.rel (%p1657) target = $region64
        $region63: #{projector_forward.4} parent=55 // pred_region
          %p1660 = scmp.lt.s32.totalorder %s20, 1
          %s1661 = scalar_select %p1660, %s20, 1
          %s1662 = smul.addr %s1661, 4
          %s1663 = smul.addr %s1662, 2
          %s1664 = scalar_lea.vmem %s6, %s1663
        $region64: #{projector_forward.4} parent=55 // pred_fallthru
          _
      $region56: #{projector_forward.4} parent=5 // pred_fallthru
        _
    $region6: #{projector_forward.4} parent=1 // loop_footer
      %s18 = sadd.s32 1, %s14
    $region7: #{projector_forward.4} parent=1 // loop_footer_branch
      %13 = sbr.rel target = $region3
    $region8: #{projector_forward.4} parent=1 // loop_exit
      _
    %1665 = vsyncpa [#allocation3], 1
    %s1666 = scalar_lea.sflag [#allocation3], 1
    %1667 = vsyncpa %s1666, 1

</llo_original>
